<compile_context>
chip_gen: v7x
topology: tpu7x:2x2x1
jax: 0.10.0
libtpu: 0.0.40
codegen_flags: <defaults>
</compile_context>

<pallas_src>
import functools

import jax
import jax.numpy as jnp
from jax.experimental import pallas as pl
from jax.experimental.pallas import tpu as pltpu


# ConvTranspose2d(k=4, s=2, p=1) phase decomposition.
# Output pixel (2m+a, 2q+b) reads input pixel (m+dh, q+dw) through kernel tap (kh, kw):
#   parity 0: (dh=0, kh=1), (dh=-1, kh=3);  parity 1: (dh=+1, kh=0), (dh=0, kh=2)
_PARITY_TAPS = ({0: 1, -1: 3}, {1: 0, 0: 2})            # parity -> {dh: kh}
_SHIFTS = ((-1, -1), (-1, 0), (-1, 1),
           (0, -1), (0, 0), (0, 1),
           (1, -1), (1, 0), (1, 1))                      # fixed (dh, dw) order
_PHASES = ((0, 0), (0, 1), (1, 0), (1, 1))               # fixed (a, b) order
_HI = jax.lax.Precision.HIGHEST


@functools.partial(jax.jit, static_argnames=("compute_dtype", "phase_major_output"))
def decoder_block(x, w1, b1, wd, bd, w2, b2,
                  compute_dtype=jnp.float32, phase_major_output=False):
    """DecoderBlock forward.

    x : (N, C_in, H, W) f32 (NCHW, as in the PyTorch module)
    w1: (C_mid, C_in, 1, 1), b1: (C_mid,)     conv1 (C_mid = C_in // 4) + ReLU
    wd: (C_mid, C_mid, 4, 4), bd: (C_mid,)    ConvTranspose2d (torch layout: in, out, kh, kw)
    w2: (C_out, C_mid, 1, 1), b2: (C_out,)    conv2 + ReLU
    returns (N, C_out, 2H, 2W) f32, or (N, 2, 2, C_out, H, W) if phase_major_output.
    compute_dtype: jnp.bfloat16 on v6e/v7x halves activation/weight DMA bytes
    (f32 accumulation either way); default f32 matches the f32 reference exactly.
    """
    n, c_in, h, w = x.shape
    c_mid = w1.shape[0]
    c_out = w2.shape[0]
    hw = h * w
    # Lane-tile-aligned zero pad of the row buffer; must cover the +-1 row shifts.
    pad = ((w + 1 + 127) // 128) * 128
    assert pad >= w + 1, "pad must cover the deconv's +-1 row shifts"
    assert pad % 128 == 0, "pad must stay 128-lane aligned"

    cdt = compute_dtype

    # ---- free layout prep + one-time operand casts (wrapper, not per grid step) ----
    x2 = x.reshape(n, c_in, hw).astype(cdt)
    w1m = w1.reshape(c_mid, c_in).astype(cdt)
    b1m = b1.reshape(c_mid, 1).astype(jnp.float32)
    w2m = w2.reshape(c_out, c_mid)

    # ---- fold conv2 (1x1, linear) into the deconv taps: one (4*C_out, C_mid) block
    # per spatial shift, rows stacked in _PHASES order (exact algebra) ---------------
    w9_list = []
    for (dh, dw) in _SHIFTS:
        rows = []
        for (a, b) in _PHASES:
            row_taps, col_taps = _PARITY_TAPS[a], _PARITY_TAPS[b]
            if dh in row_taps and dw in col_taps:
                kh, kw = row_taps[dh], col_taps[dw]
                rows.append(jnp.matmul(w2m, wd[:, :, kh, kw].T, precision=_HI))
            else:
                rows.append(jnp.zeros((c_out, c_mid), jnp.float32))
        w9_list.append(jnp.concatenate(rows, axis=0))    # (4*C_out, C_mid)
    w9 = jnp.stack(w9_list, axis=0).astype(cdt)          # (9, 4*C_out, C_mid)
    b_fold = jnp.tile(jnp.matmul(w2m, bd.reshape(c_mid, 1), precision=_HI)
                      + b2.reshape(c_out, 1), (4, 1)).astype(jnp.float32)  # (4*C_out, 1)

    # Column-validity masks for the +-1 shifts in the W direction.
    q = jnp.arange(hw, dtype=jnp.int32) % w
    wmask = jnp.stack([(q != 0), (q != w - 1)], axis=0).astype(cdt)        # (2, HW)

    def kernel(x_ref, m_ref, w1_ref, b1_ref, w9_ref, bf_ref, o_ref, hpad_ref):
        # conv1 (1x1) + ReLU: (C_mid, C_in) @ (C_in, HW) -- lane-dense HW, f32 acc.
        xb = x_ref[0]                                                  # (C_in, HW)
        h1 = jnp.dot(w1_ref[...], xb, preferred_element_type=jnp.float32)
        h1 = jnp.maximum(h1 + b1_ref[...], 0.0)                        # (C_mid, HW) f32

        # Zero-padded, 128-lane-aligned row buffer written with ONE full-ref store
        # (lane concat at 128-multiples is pure vreg placement).  Row over/underflow
        # of the +-1 row shifts lands in the zero pads; column wrap is masked below.
        zpad = jnp.zeros((c_mid, pad), cdt)
        hpad_ref[...] = jnp.concatenate([zpad, h1.astype(cdt), zpad], axis=1)

        mask = m_ref[...]                                              # (2, HW)
        # deconv (all 4 output-parity phases) + folded conv2: nine small accumulating
        # MXU dots straight from vregs -- no partial-sublane scratch stores.
        acc = None
        for i, (dh, dw) in enumerate(_SHIFTS):
            start = pad + dh * w + dw                                  # static lane offset
            s = hpad_ref[:, start:start + hw]                          # (C_mid, HW)
            if dw == -1:
                s = s * mask[0:1, :]                                   # zero wrapped column q==0
            elif dw == 1:
                s = s * mask[1:2, :]                                   # zero wrapped column q==W-1
            contrib = jnp.dot(w9_ref[i], s, preferred_element_type=jnp.float32)
            acc = contrib if acc is None else acc + contrib            # (4*C_out, HW) f32

        y = jnp.maximum(acc + bf_ref[...], 0.0)
        o_ref[0] = y.astype(o_ref.dtype)                               # single full-tile store

    out_flat = pl.pallas_call(
        kernel,
        out_shape=jax.ShapeDtypeStruct((n, 4 * c_out, hw), jnp.float32),
        grid=(n,),
        in_specs=[
            pl.BlockSpec((1, c_in, hw), lambda i: (i, 0, 0)),
            pl.BlockSpec((2, hw), lambda i: (0, 0)),
            pl.BlockSpec((c_mid, c_in), lambda i: (0, 0)),
            pl.BlockSpec((c_mid, 1), lambda i: (0, 0)),
            pl.BlockSpec((9, 4 * c_out, c_mid), lambda i: (0, 0, 0)),
            pl.BlockSpec((4 * c_out, 1), lambda i: (0, 0)),
        ],
        out_specs=pl.BlockSpec((1, 4 * c_out, hw), lambda i: (i, 0, 0)),
        scratch_shapes=[
            pltpu.VMEM((c_mid, hw + 2 * pad), cdt),      # zero-padded conv1 row buffer
        ],
        compiler_params=pltpu.CompilerParams(dimension_semantics=("parallel",)),
    )(x2, wmask, w1m, b1m, w9, b_fold)

    # Rows of out_flat are (phase a, phase b, channel) in _PHASES order.
    out_phases = out_flat.reshape(n, 2, 2, c_out, h, w)                # free reshape
    if phase_major_output:
        return out_phases                                              # no extra HBM pass
    # Phase interleave back to NCHW: out[n, c, 2m+a, 2q+b] = phases[n, a, b, c, m, q].
    # This is the one remaining full-tensor layout pass; pass phase_major_output=True
    # if the downstream consumer can take the phase-major layout.
    out = jnp.transpose(out_phases, (0, 3, 4, 1, 5, 2)).reshape(n, c_out, 2 * h, 2 * w)
    return out


if __name__ == "__main__":
    # DecoderBlock(in_channels=16, out_channels=8), small NCHW input.
    in_channels, out_channels = 16, 8
    c_mid = in_channels // 4
    N, H, W = 2, 16, 16

    key = jax.random.PRNGKey(0)
    keys = jax.random.split(key, 7)
    x = jax.random.normal(keys[0], (N, in_channels, H, W), dtype=jnp.float32)

    def uinit(k, shape, fan_in):
        bound = 1.0 / (fan_in ** 0.5)
        return jax.random.uniform(k, shape, minval=-bound, maxval=bound, dtype=jnp.float32)

    # conv1: Conv2d(in_channels, in_channels // 4, 1)
    w1 = uinit(keys[1], (c_mid, in_channels, 1, 1), in_channels)
    b1 = uinit(keys[2], (c_mid,), in_channels)
    # deconv: ConvTranspose2d(c_mid, c_mid, 4, stride=2, padding=1); torch weight (in, out, kh, kw)
    wd = uinit(keys[3], (c_mid, c_mid, 4, 4), c_mid * 16)
    bd = uinit(keys[4], (c_mid,), c_mid * 16)
    # conv2: Conv2d(c_mid, out_channels, 1)
    w2 = uinit(keys[5], (out_channels, c_mid, 1, 1), c_mid)
    b2 = uinit(keys[6], (out_channels,), c_mid)

    out = decoder_block(x, w1, b1, wd, bd, w2, b2)      # f32 path: matches f32 reference
    out = jax.block_until_ready(out)
    assert out.shape == (N, out_channels, 2 * H, 2 * W), out.shape

    # ---- unfused XLA reference (exactly the module's forward) -------------------
    hi = jax.lax.Precision.HIGHEST
    ref = jax.lax.conv_general_dilated(
        x, w1, (1, 1), ((0, 0), (0, 0)),
        dimension_numbers=("NCHW", "OIHW", "NCHW"), precision=hi)
    ref = jnp.maximum(ref + b1[None, :, None, None], 0.0)
    # ConvTranspose2d(k=4, s=2, p=1) == conv(lhs_dilation=2, pad=k-1-p=2) with the
    # spatially-flipped weight transposed to OIHW.
    wd_oihw = jnp.flip(jnp.transpose(wd, (1, 0, 2, 3)), axis=(2, 3))
    ref = jax.lax.conv_general_dilated(
        ref, wd_oihw, (1, 1), ((2, 2), (2, 2)), lhs_dilation=(2, 2),
        dimension_numbers=("NCHW", "OIHW", "NCHW"), precision=hi)
    ref = ref + bd[None, :, None, None]
    ref = jax.lax.conv_general_dilated(
        ref, w2, (1, 1), ((0, 0), (0, 0)),
        dimension_numbers=("NCHW", "OIHW", "NCHW"), precision=hi)
    ref = jnp.maximum(ref + b2[None, :, None, None], 0.0)

    err = float(jnp.max(jnp.abs(out - ref)))
    assert jnp.allclose(out, ref, atol=1e-3, rtol=1e-3), err

    print("KERNEL_OK")
</pallas_src>

<mosaic_0001>
module attributes {stable_mosaic.version = 11 : i64} {
  func.func @kernel(%arg0: i32, %arg1: memref<1x16x256xf32, #tpu.memory_space<vmem>>, %arg2: memref<2x256xf32, #tpu.memory_space<vmem>>, %arg3: memref<4x16xf32, #tpu.memory_space<vmem>>, %arg4: memref<4x1xf32, #tpu.memory_space<vmem>>, %arg5: memref<9x32x4xf32, #tpu.memory_space<vmem>>, %arg6: memref<32x1xf32, #tpu.memory_space<vmem>>, %arg7: memref<1x32x256xf32, #tpu.memory_space<vmem>>, %arg8: memref<4x512xf32, #tpu.memory_space<vmem>>) attributes {dimension_semantics = [#tpu.dimension_semantics<parallel>], iteration_bounds = array<i64: 2>, scalar_prefetch = 0 : i64, scratch_operands = 1 : i64, tpu.core_type = #tpu.core_type<tc>, window_params = [{transform_indices = @transform_0, window_bounds = array<i64: 1, 16, 256>}, {pipeline_mode = #tpu.pipeline_mode<synchronous>, transform_indices = @transform_1, window_bounds = array<i64: 2, 256>}, {pipeline_mode = #tpu.pipeline_mode<synchronous>, transform_indices = @transform_2, window_bounds = array<i64: 4, 16>}, {pipeline_mode = #tpu.pipeline_mode<synchronous>, transform_indices = @transform_3, window_bounds = array<i64: 4, 1>}, {pipeline_mode = #tpu.pipeline_mode<synchronous>, transform_indices = @transform_4, window_bounds = array<i64: 9, 32, 4>}, {pipeline_mode = #tpu.pipeline_mode<synchronous>, transform_indices = @transform_5, window_bounds = array<i64: 32, 1>}, {transform_indices = @transform_6, window_bounds = array<i64: 1, 32, 256>}]} {
    %c0 = arith.constant 0 : index
    %c0_0 = arith.constant 0 : index
    %c0_1 = arith.constant 0 : index
    %0 = vector.load %arg1[%c0, %c0_0, %c0_1] : memref<1x16x256xf32, #tpu.memory_space<vmem>>, vector<1x16x256xf32>
    %1 = vector.shape_cast %0 : vector<1x16x256xf32> to vector<16x256xf32>
    %c0_2 = arith.constant 0 : index
    %c0_3 = arith.constant 0 : index
    %2 = vector.load %arg3[%c0_2, %c0_3] : memref<4x16xf32, #tpu.memory_space<vmem>>, vector<4x16xf32>
    %cst = arith.constant dense<0.000000e+00> : vector<4x256xf32>
    %3 = tpu.matmul %2, %1, %cst {dimension_numbers = #tpu.dot_dimension_numbers<[1], [0], [0], [1], [0, 0, 1, 1], [], []>} : vector<4x16xf32>, vector<16x256xf32>, vector<4x256xf32> -> vector<4x256xf32>
    %c0_4 = arith.constant 0 : index
    %c0_5 = arith.constant 0 : index
    %4 = vector.load %arg4[%c0_4, %c0_5] : memref<4x1xf32, #tpu.memory_space<vmem>>, vector<4x1xf32>
    %5 = vector.broadcast %4 : vector<4x1xf32> to vector<4x256xf32>
    %6 = arith.addf %3, %5 : vector<4x256xf32>
    %cst_6 = arith.constant 0.000000e+00 : f32
    %7 = vector.broadcast %cst_6 : f32 to vector<4x256xf32>
    %8 = arith.maximumf %6, %7 : vector<4x256xf32>
    %cst_7 = arith.constant 0.000000e+00 : f32
    %9 = vector.broadcast %cst_7 : f32 to vector<4x128xf32>
    %10 = tpu.concatenate %9, %8, %9 in 1 : vector<4x128xf32>, vector<4x256xf32>, vector<4x128xf32> -> vector<4x512xf32>
    %c0_8 = arith.constant 0 : index
    %c0_9 = arith.constant 0 : index
    %11 = vector.load %arg8[%c0_8, %c0_9] : memref<4x512xf32, #tpu.memory_space<vmem>>, vector<4x512xf32>
    tpu.vector_store %arg8[%c0_8, %c0_9], %10 {strides = array<i32>} : memref<4x512xf32, #tpu.memory_space<vmem>>, vector<4x512xf32>,
    %c0_10 = arith.constant 0 : index
    %c0_11 = arith.constant 0 : index
    %12 = vector.load %arg2[%c0_10, %c0_11] : memref<2x256xf32, #tpu.memory_space<vmem>>, vector<2x256xf32>
    %c0_12 = arith.constant 0 : index
    %c111 = arith.constant 111 : index
    %13 = vector.load %arg8[%c0_12, %c111] : memref<4x512xf32, #tpu.memory_space<vmem>>, vector<4x256xf32>
    %14 = vector.extract_strided_slice %12 {offsets = [0, 0], sizes = [1, 256], strides = [1, 1]} : vector<2x256xf32> to vector<1x256xf32>
    %15 = vector.broadcast %14 : vector<1x256xf32> to vector<4x256xf32>
    %16 = arith.mulf %13, %15 : vector<4x256xf32>
    %c0_13 = arith.constant 0 : index
    %c0_14 = arith.constant 0 : index
    %c0_15 = arith.constant 0 : index
    %17 = vector.load %arg5[%c0_13, %c0_14, %c0_15] : memref<9x32x4xf32, #tpu.memory_space<vmem>>, vector<1x32x4xf32>
    %18 = vector.shape_cast %17 : vector<1x32x4xf32> to vector<32x4xf32>
    %cst_16 = arith.constant dense<0.000000e+00> : vector<32x256xf32>
    %19 = tpu.matmul %18, %16, %cst_16 {dimension_numbers = #tpu.dot_dimension_numbers<[1], [0], [0], [1], [0, 0, 1, 1], [], []>} : vector<32x4xf32>, vector<4x256xf32>, vector<32x256xf32> -> vector<32x256xf32>
    %c0_17 = arith.constant 0 : index
    %c112 = arith.constant 112 : index
    %20 = vector.load %arg8[%c0_17, %c112] : memref<4x512xf32, #tpu.memory_space<vmem>>, vector<4x256xf32>
    %c1 = arith.constant 1 : index
    %c0_18 = arith.constant 0 : index
    %c0_19 = arith.constant 0 : index
    %21 = vector.load %arg5[%c1, %c0_18, %c0_19] : memref<9x32x4xf32, #tpu.memory_space<vmem>>, vector<1x32x4xf32>
    %22 = vector.shape_cast %21 : vector<1x32x4xf32> to vector<32x4xf32>
    %cst_20 = arith.constant dense<0.000000e+00> : vector<32x256xf32>
    %23 = tpu.matmul %22, %20, %cst_20 {dimension_numbers = #tpu.dot_dimension_numbers<[1], [0], [0], [1], [0, 0, 1, 1], [], []>} : vector<32x4xf32>, vector<4x256xf32>, vector<32x256xf32> -> vector<32x256xf32>
    %24 = arith.addf %19, %23 : vector<32x256xf32>
    %c0_21 = arith.constant 0 : index
    %c113 = arith.constant 113 : index
    %25 = vector.load %arg8[%c0_21, %c113] : memref<4x512xf32, #tpu.memory_space<vmem>>, vector<4x256xf32>
    %26 = vector.extract_strided_slice %12 {offsets = [1, 0], sizes = [1, 256], strides = [1, 1]} : vector<2x256xf32> to vector<1x256xf32>
    %27 = vector.broadcast %26 : vector<1x256xf32> to vector<4x256xf32>
    %28 = arith.mulf %25, %27 : vector<4x256xf32>
    %c2 = arith.constant 2 : index
    %c0_22 = arith.constant 0 : index
    %c0_23 = arith.constant 0 : index
    %29 = vector.load %arg5[%c2, %c0_22, %c0_23] : memref<9x32x4xf32, #tpu.memory_space<vmem>>, vector<1x32x4xf32>
    %30 = vector.shape_cast %29 : vector<1x32x4xf32> to vector<32x4xf32>
    %cst_24 = arith.constant dense<0.000000e+00> : vector<32x256xf32>
    %31 = tpu.matmul %30, %28, %cst_24 {dimension_numbers = #tpu.dot_dimension_numbers<[1], [0], [0], [1], [0, 0, 1, 1], [], []>} : vector<32x4xf32>, vector<4x256xf32>, vector<32x256xf32> -> vector<32x256xf32>
    %32 = arith.addf %24, %31 : vector<32x256xf32>
    %c0_25 = arith.constant 0 : index
    %c127 = arith.constant 127 : index
    %33 = vector.load %arg8[%c0_25, %c127] : memref<4x512xf32, #tpu.memory_space<vmem>>, vector<4x256xf32>
    %34 = vector.extract_strided_slice %12 {offsets = [0, 0], sizes = [1, 256], strides = [1, 1]} : vector<2x256xf32> to vector<1x256xf32>
    %35 = vector.broadcast %34 : vector<1x256xf32> to vector<4x256xf32>
    %36 = arith.mulf %33, %35 : vector<4x256xf32>
    %c3 = arith.constant 3 : index
    %c0_26 = arith.constant 0 : index
    %c0_27 = arith.constant 0 : index
    %37 = vector.load %arg5[%c3, %c0_26, %c0_27] : memref<9x32x4xf32, #tpu.memory_space<vmem>>, vector<1x32x4xf32>
    %38 = vector.shape_cast %37 : vector<1x32x4xf32> to vector<32x4xf32>
    %cst_28 = arith.constant dense<0.000000e+00> : vector<32x256xf32>
    %39 = tpu.matmul %38, %36, %cst_28 {dimension_numbers = #tpu.dot_dimension_numbers<[1], [0], [0], [1], [0, 0, 1, 1], [], []>} : vector<32x4xf32>, vector<4x256xf32>, vector<32x256xf32> -> vector<32x256xf32>
    %40 = arith.addf %32, %39 : vector<32x256xf32>
    %c0_29 = arith.constant 0 : index
    %c128 = arith.constant 128 : index
    %41 = vector.load %arg8[%c0_29, %c128] : memref<4x512xf32, #tpu.memory_space<vmem>>, vector<4x256xf32>
    %c4 = arith.constant 4 : index
    %c0_30 = arith.constant 0 : index
    %c0_31 = arith.constant 0 : index
    %42 = vector.load %arg5[%c4, %c0_30, %c0_31] : memref<9x32x4xf32, #tpu.memory_space<vmem>>, vector<1x32x4xf32>
    %43 = vector.shape_cast %42 : vector<1x32x4xf32> to vector<32x4xf32>
    %cst_32 = arith.constant dense<0.000000e+00> : vector<32x256xf32>
    %44 = tpu.matmul %43, %41, %cst_32 {dimension_numbers = #tpu.dot_dimension_numbers<[1], [0], [0], [1], [0, 0, 1, 1], [], []>} : vector<32x4xf32>, vector<4x256xf32>, vector<32x256xf32> -> vector<32x256xf32>
    %45 = arith.addf %40, %44 : vector<32x256xf32>
    %c0_33 = arith.constant 0 : index
    %c129 = arith.constant 129 : index
    %46 = vector.load %arg8[%c0_33, %c129] : memref<4x512xf32, #tpu.memory_space<vmem>>, vector<4x256xf32>
    %47 = vector.extract_strided_slice %12 {offsets = [1, 0], sizes = [1, 256], strides = [1, 1]} : vector<2x256xf32> to vector<1x256xf32>
    %48 = vector.broadcast %47 : vector<1x256xf32> to vector<4x256xf32>
    %49 = arith.mulf %46, %48 : vector<4x256xf32>
    %c5 = arith.constant 5 : index
    %c0_34 = arith.constant 0 : index
    %c0_35 = arith.constant 0 : index
    %50 = vector.load %arg5[%c5, %c0_34, %c0_35] : memref<9x32x4xf32, #tpu.memory_space<vmem>>, vector<1x32x4xf32>
    %51 = vector.shape_cast %50 : vector<1x32x4xf32> to vector<32x4xf32>
    %cst_36 = arith.constant dense<0.000000e+00> : vector<32x256xf32>
    %52 = tpu.matmul %51, %49, %cst_36 {dimension_numbers = #tpu.dot_dimension_numbers<[1], [0], [0], [1], [0, 0, 1, 1], [], []>} : vector<32x4xf32>, vector<4x256xf32>, vector<32x256xf32> -> vector<32x256xf32>
    %53 = arith.addf %45, %52 : vector<32x256xf32>
    %c0_37 = arith.constant 0 : index
    %c143 = arith.constant 143 : index
    %54 = vector.load %arg8[%c0_37, %c143] : memref<4x512xf32, #tpu.memory_space<vmem>>, vector<4x256xf32>
    %55 = vector.extract_strided_slice %12 {offsets = [0, 0], sizes = [1, 256], strides = [1, 1]} : vector<2x256xf32> to vector<1x256xf32>
    %56 = vector.broadcast %55 : vector<1x256xf32> to vector<4x256xf32>
    %57 = arith.mulf %54, %56 : vector<4x256xf32>
    %c6 = arith.constant 6 : index
    %c0_38 = arith.constant 0 : index
    %c0_39 = arith.constant 0 : index
    %58 = vector.load %arg5[%c6, %c0_38, %c0_39] : memref<9x32x4xf32, #tpu.memory_space<vmem>>, vector<1x32x4xf32>
    %59 = vector.shape_cast %58 : vector<1x32x4xf32> to vector<32x4xf32>
    %cst_40 = arith.constant dense<0.000000e+00> : vector<32x256xf32>
    %60 = tpu.matmul %59, %57, %cst_40 {dimension_numbers = #tpu.dot_dimension_numbers<[1], [0], [0], [1], [0, 0, 1, 1], [], []>} : vector<32x4xf32>, vector<4x256xf32>, vector<32x256xf32> -> vector<32x256xf32>
    %61 = arith.addf %53, %60 : vector<32x256xf32>
    %c0_41 = arith.constant 0 : index
    %c144 = arith.constant 144 : index
    %62 = vector.load %arg8[%c0_41, %c144] : memref<4x512xf32, #tpu.memory_space<vmem>>, vector<4x256xf32>
    %c7 = arith.constant 7 : index
    %c0_42 = arith.constant 0 : index
    %c0_43 = arith.constant 0 : index
    %63 = vector.load %arg5[%c7, %c0_42, %c0_43] : memref<9x32x4xf32, #tpu.memory_space<vmem>>, vector<1x32x4xf32>
    %64 = vector.shape_cast %63 : vector<1x32x4xf32> to vector<32x4xf32>
    %cst_44 = arith.constant dense<0.000000e+00> : vector<32x256xf32>
    %65 = tpu.matmul %64, %62, %cst_44 {dimension_numbers = #tpu.dot_dimension_numbers<[1], [0], [0], [1], [0, 0, 1, 1], [], []>} : vector<32x4xf32>, vector<4x256xf32>, vector<32x256xf32> -> vector<32x256xf32>
    %66 = arith.addf %61, %65 : vector<32x256xf32>
    %c0_45 = arith.constant 0 : index
    %c145 = arith.constant 145 : index
    %67 = vector.load %arg8[%c0_45, %c145] : memref<4x512xf32, #tpu.memory_space<vmem>>, vector<4x256xf32>
    %68 = vector.extract_strided_slice %12 {offsets = [1, 0], sizes = [1, 256], strides = [1, 1]} : vector<2x256xf32> to vector<1x256xf32>
    %69 = vector.broadcast %68 : vector<1x256xf32> to vector<4x256xf32>
    %70 = arith.mulf %67, %69 : vector<4x256xf32>
    %c8 = arith.constant 8 : index
    %c0_46 = arith.constant 0 : index
    %c0_47 = arith.constant 0 : index
    %71 = vector.load %arg5[%c8, %c0_46, %c0_47] : memref<9x32x4xf32, #tpu.memory_space<vmem>>, vector<1x32x4xf32>
    %72 = vector.shape_cast %71 : vector<1x32x4xf32> to vector<32x4xf32>
    %cst_48 = arith.constant dense<0.000000e+00> : vector<32x256xf32>
    %73 = tpu.matmul %72, %70, %cst_48 {dimension_numbers = #tpu.dot_dimension_numbers<[1], [0], [0], [1], [0, 0, 1, 1], [], []>} : vector<32x4xf32>, vector<4x256xf32>, vector<32x256xf32> -> vector<32x256xf32>
    %74 = arith.addf %66, %73 : vector<32x256xf32>
    %c0_49 = arith.constant 0 : index
    %c0_50 = arith.constant 0 : index
    %75 = vector.load %arg6[%c0_49, %c0_50] : memref<32x1xf32, #tpu.memory_space<vmem>>, vector<32x1xf32>
    %76 = vector.broadcast %75 : vector<32x1xf32> to vector<32x256xf32>
    %77 = arith.addf %74, %76 : vector<32x256xf32>
    %cst_51 = arith.constant 0.000000e+00 : f32
    %78 = vector.broadcast %cst_51 : f32 to vector<32x256xf32>
    %79 = arith.maximumf %77, %78 : vector<32x256xf32>
    %c0_52 = arith.constant 0 : index
    %c0_53 = arith.constant 0 : index
    %c0_54 = arith.constant 0 : index
    %80 = vector.load %arg7[%c0_52, %c0_53, %c0_54] : memref<1x32x256xf32, #tpu.memory_space<vmem>>, vector<1x32x256xf32>
    %81 = vector.shape_cast %80 : vector<1x32x256xf32> to vector<32x256xf32>
    %82 = vector.shape_cast %79 : vector<32x256xf32> to vector<1x32x256xf32>
    tpu.vector_store %arg7[%c0_52, %c0_53, %c0_54], %82 {strides = array<i32>} : memref<1x32x256xf32, #tpu.memory_space<vmem>>, vector<1x32x256xf32>,
    return
  }
  func.func @transform_0(%arg0: i32) -> (i32, i32, i32) {
    %c0_i32 = arith.constant 0 : i32
    %c0_i32_0 = arith.constant 0 : i32
    %c0_i32_1 = arith.constant 0 : i32
    return %arg0, %c0_i32, %c0_i32_0 : i32, i32, i32
  }
  func.func @transform_1(%arg0: i32) -> (i32, i32) {
    %c0_i32 = arith.constant 0 : i32
    %c0_i32_0 = arith.constant 0 : i32
    %c0_i32_1 = arith.constant 0 : i32
    return %c0_i32, %c0_i32_0 : i32, i32
  }
  func.func @transform_2(%arg0: i32) -> (i32, i32) {
    %c0_i32 = arith.constant 0 : i32
    %c0_i32_0 = arith.constant 0 : i32
    %c0_i32_1 = arith.constant 0 : i32
    return %c0_i32, %c0_i32_0 : i32, i32
  }
  func.func @transform_3(%arg0: i32) -> (i32, i32) {
    %c0_i32 = arith.constant 0 : i32
    %c0_i32_0 = arith.constant 0 : i32
    %c0_i32_1 = arith.constant 0 : i32
    return %c0_i32, %c0_i32_0 : i32, i32
  }
  func.func @transform_4(%arg0: i32) -> (i32, i32, i32) {
    %c0_i32 = arith.constant 0 : i32
    %c0_i32_0 = arith.constant 0 : i32
    %c0_i32_1 = arith.constant 0 : i32
    %c0_i32_2 = arith.constant 0 : i32
    return %c0_i32, %c0_i32_0, %c0_i32_1 : i32, i32, i32
  }
  func.func @transform_5(%arg0: i32) -> (i32, i32) {
    %c0_i32 = arith.constant 0 : i32
    %c0_i32_0 = arith.constant 0 : i32
    %c0_i32_1 = arith.constant 0 : i32
    return %c0_i32, %c0_i32_0 : i32, i32
  }
  func.func @transform_6(%arg0: i32) -> (i32, i32, i32) {
    %c0_i32 = arith.constant 0 : i32
    %c0_i32_0 = arith.constant 0 : i32
    %c0_i32_1 = arith.constant 0 : i32
    return %arg0, %c0_i32, %c0_i32_0 : i32, i32, i32
  }
}

</mosaic_0001>

<llo_original>
// kernel: decoder_block.1
$region0: #{decoder_block.1}
  #allocation0 [shape = 'u32[]', space=smem, size = 0x4, offset = 0x4, fixed_abs, tag = 'smem constant byte address 0x4 - core index']
  #allocation1 [shape = 'u32[144,128]{1,0:T(1,128)}', space=vmem, size = 0x12000, scoped, tag = 'internal scratch']
  #allocation2 [shape = 'f32[4,512]{1,0:T(4,128)}', space=vmem, size = 0x2000, scoped, tag = 'scratch operand']
  %s0 = inlined_call_operand.vmem [shape: f32[2,16,256], index: 0, kind: input, shape index: {}]
  %s1 = inlined_call_operand.vmem [shape: f32[2,256], index: 1, kind: input, shape index: {}]
  %s2 = inlined_call_operand.vmem [shape: f32[4,16], index: 2, kind: input, shape index: {}]
  %s3 = inlined_call_operand.vmem [shape: f32[4,1], index: 3, kind: input, shape index: {}]
  %s4 = inlined_call_operand.vmem [shape: f32[9,32,4], index: 4, kind: input, shape index: {}]
  %s5 = inlined_call_operand.vmem [shape: f32[32,1], index: 5, kind: input, shape index: {}]
  %s6 = inlined_call_operand.vmem [shape: f32[2,32,256], index: 6, kind: output, shape index: {}]
  %s7 = sld [smem:[#allocation0]]
  $region57: #{decoder_block.1} parent=0
    _
  %s9 = ssub.s32 1, %s7
  %s10 = scalar_select 0, %s9, %s7
  loop: start=0, step=1, limit=4
  $region2: #{decoder_block.1} parent=0 // loop_pre_header
    _
  $region3: #{decoder_block.1} parent=0 // loop_header
    %s12 = sphi 0, %s16
    %p13 = scmp.ge.s32.totalorder %s12, 4
    %s22 = sphi 0, %s24
    %s25 = sphi 0, %s22
    %s26 = sphi 0, %s25
    %s42 = sphi 0, %s26
    %s46 = sphi 0, %s46
    %s48 = sphi 0, %s46
    %s49 = sphi 0, %s48
    %s63 = sphi 0, %s49
    %s67 = sphi 0, %s67
    %s69 = sphi 0, %s67
    %s70 = sphi 0, %s69
    %s84 = sphi 0, %s70
    %s88 = sphi 0, %s88
    %s90 = sphi 0, %s88
    %s91 = sphi 0, %s90
    %s105 = sphi 0, %s91
    %s109 = sphi 0, %s109
    %s111 = sphi 0, %s109
    %s112 = sphi 0, %s111
    %s126 = sphi 0, %s112
    %s130 = sphi 0, %s130
    %s132 = sphi 0, %s130
    %s133 = sphi 0, %s132
    %s147 = sphi 0, %s133
    %s153 = sphi 0, %s155
    %s156 = sphi 0, %s153
    %s157 = sphi 0, %s156
    %s173 = sphi 0, %s157
  $region4: #{decoder_block.1} parent=0 // loop_header_branch
    %15 = sbr.rel (%p13) target = $region8
  $region5: #{decoder_block.1} parent=0 // loop_body
    %s17 = ssub.s32 %s12, 1
    %s18 = ssub.s32 %s12, 2
    %s19 = sadd.s32 %s12, 1
    %s20 = ssub.s32 %s12, %s19
    %p21 = scmp.eq.s32.totalorder %s20, 0
    %s23 = sadd.s32 %s22, 1
    %s24 = scalar_select %p21, %s22, %s23
    %p27 = pneg %p21
    %p28 = scmp.eq.s32.totalorder %s12, 1
    %p29 = por %p27, %p28
    %p30 = scmp.ne.s32.totalorder %s22, %s25
    %p31 = scmp.eq.s32.totalorder %s12, 0
    %p32 = por %p30, %p31
    %p33 = scmp.ne.s32.totalorder %s22, %s25
    %p34 = scmp.eq.s32.totalorder %s17, 1
    %p35 = por %p33, %p34
    %p36 = scmp.ne.s32.totalorder %s25, %s26
    %p37 = scmp.eq.s32.totalorder %s17, 0
    %p38 = por %p36, %p37
    %p39 = scmp.ne.s32.totalorder %s25, %s26
    %p40 = scmp.eq.s32.totalorder %s18, 1
    %p41 = por %p39, %p40
    %p43 = scmp.ne.s32.totalorder %s26, %s42
    %p44 = scmp.eq.s32.totalorder %s18, 0
    %p45 = por %p43, %p44
    %s47 = sadd.s32 %s46, 1
    %p50 = scmp.eq.s32.totalorder %s12, 1
    %p51 = scmp.ne.s32.totalorder %s46, %s48
    %p52 = scmp.eq.s32.totalorder %s12, 0
    %p53 = por %p51, %p52
    %p54 = scmp.ne.s32.totalorder %s46, %s48
    %p55 = scmp.eq.s32.totalorder %s17, 1
    %p56 = por %p54, %p55
    %p57 = scmp.ne.s32.totalorder %s48, %s49
    %p58 = scmp.eq.s32.totalorder %s17, 0
    %p59 = por %p57, %p58
    %p60 = scmp.ne.s32.totalorder %s48, %s49
    %p61 = scmp.eq.s32.totalorder %s18, 1
    %p62 = por %p60, %p61
    %p64 = scmp.ne.s32.totalorder %s49, %s63
    %p65 = scmp.eq.s32.totalorder %s18, 0
    %p66 = por %p64, %p65
    %s68 = sadd.s32 %s67, 1
    %p71 = scmp.eq.s32.totalorder %s12, 1
    %p72 = scmp.ne.s32.totalorder %s67, %s69
    %p73 = scmp.eq.s32.totalorder %s12, 0
    %p74 = por %p72, %p73
    %p75 = scmp.ne.s32.totalorder %s67, %s69
    %p76 = scmp.eq.s32.totalorder %s17, 1
    %p77 = por %p75, %p76
    %p78 = scmp.ne.s32.totalorder %s69, %s70
    %p79 = scmp.eq.s32.totalorder %s17, 0
    %p80 = por %p78, %p79
    %p81 = scmp.ne.s32.totalorder %s69, %s70
    %p82 = scmp.eq.s32.totalorder %s18, 1
    %p83 = por %p81, %p82
    %p85 = scmp.ne.s32.totalorder %s70, %s84
    %p86 = scmp.eq.s32.totalorder %s18, 0
    %p87 = por %p85, %p86
    %s89 = sadd.s32 %s88, 1
    %p92 = scmp.eq.s32.totalorder %s12, 1
    %p93 = scmp.ne.s32.totalorder %s88, %s90
    %p94 = scmp.eq.s32.totalorder %s12, 0
    %p95 = por %p93, %p94
    %p96 = scmp.ne.s32.totalorder %s88, %s90
    %p97 = scmp.eq.s32.totalorder %s17, 1
    %p98 = por %p96, %p97
    %p99 = scmp.ne.s32.totalorder %s90, %s91
    %p100 = scmp.eq.s32.totalorder %s17, 0
    %p101 = por %p99, %p100
    %p102 = scmp.ne.s32.totalorder %s90, %s91
    %p103 = scmp.eq.s32.totalorder %s18, 1
    %p104 = por %p102, %p103
    %p106 = scmp.ne.s32.totalorder %s91, %s105
    %p107 = scmp.eq.s32.totalorder %s18, 0
    %p108 = por %p106, %p107
    %s110 = sadd.s32 %s109, 1
    %p113 = scmp.eq.s32.totalorder %s12, 1
    %p114 = scmp.ne.s32.totalorder %s109, %s111
    %p115 = scmp.eq.s32.totalorder %s12, 0
    %p116 = por %p114, %p115
    %p117 = scmp.ne.s32.totalorder %s109, %s111
    %p118 = scmp.eq.s32.totalorder %s17, 1
    %p119 = por %p117, %p118
    %p120 = scmp.ne.s32.totalorder %s111, %s112
    %p121 = scmp.eq.s32.totalorder %s17, 0
    %p122 = por %p120, %p121
    %p123 = scmp.ne.s32.totalorder %s111, %s112
    %p124 = scmp.eq.s32.totalorder %s18, 1
    %p125 = por %p123, %p124
    %p127 = scmp.ne.s32.totalorder %s112, %s126
    %p128 = scmp.eq.s32.totalorder %s18, 0
    %p129 = por %p127, %p128
    %s131 = sadd.s32 %s130, 1
    %p134 = scmp.eq.s32.totalorder %s12, 1
    %p135 = scmp.ne.s32.totalorder %s130, %s132
    %p136 = scmp.eq.s32.totalorder %s12, 0
    %p137 = por %p135, %p136
    %p138 = scmp.ne.s32.totalorder %s130, %s132
    %p139 = scmp.eq.s32.totalorder %s17, 1
    %p140 = por %p138, %p139
    %p141 = scmp.ne.s32.totalorder %s132, %s133
    %p142 = scmp.eq.s32.totalorder %s17, 0
    %p143 = por %p141, %p142
    %p144 = scmp.ne.s32.totalorder %s132, %s133
    %p145 = scmp.eq.s32.totalorder %s18, 1
    %p146 = por %p144, %p145
    %p148 = scmp.ne.s32.totalorder %s133, %s147
    %p149 = scmp.eq.s32.totalorder %s18, 0
    %p150 = por %p148, %p149
    %s151 = ssub.s32 %s12, %s19
    %p152 = scmp.eq.s32.totalorder %s151, 0
    %s154 = sadd.s32 %s153, 1
    %s155 = scalar_select %p152, %s153, %s154
    %p158 = pneg %p152
    %p159 = scmp.eq.s32.totalorder %s12, 1
    %p160 = por %p158, %p159
    %p161 = scmp.ne.s32.totalorder %s153, %s156
    %p162 = scmp.eq.s32.totalorder %s12, 0
    %p163 = por %p161, %p162
    %p164 = scmp.ne.s32.totalorder %s153, %s156
    %p165 = scmp.eq.s32.totalorder %s17, 1
    %p166 = por %p164, %p165
    %p167 = scmp.ne.s32.totalorder %s156, %s157
    %p168 = scmp.eq.s32.totalorder %s17, 0
    %p169 = por %p167, %p168
    %p170 = scmp.ne.s32.totalorder %s156, %s157
    %p171 = scmp.eq.s32.totalorder %s18, 1
    %p172 = por %p170, %p171
    %p174 = scmp.ne.s32.totalorder %s157, %s173
    %p175 = scmp.eq.s32.totalorder %s18, 0
    %p176 = por %p174, %p175
    %p177 = scmp.le.s32.totalorder 1, %s12
    %p178 = scmp.lt.s32.totalorder %s12, 3
    %p179 = pnand %p177, %p178
    %p180 = pneg %p179
    // Predicated region
    $region9: #{decoder_block.1} parent=5 // pred_check
      _
    $region10: #{decoder_block.1} parent=5 // pred_check_branch
      %182 = sbr.rel (%p179) target = $region12
    $region11: #{decoder_block.1} parent=5 // pred_region
      %s183 = ssub.s32 %s12, 1
      // Predicated region
      $region13: #{decoder_block.1} parent=11 // pred_check
        %p184 = pneg %p59
      $region14: #{decoder_block.1} parent=11 // pred_check_branch
        %186 = sbr.rel (%p184) target = $region16
      $region15: #{decoder_block.1} parent=11 // pred_region
        _
      $region16: #{decoder_block.1} parent=11 // pred_fallthru
        _
      // Predicated region
      $region17: #{decoder_block.1} parent=11 // pred_check
        %p187 = pneg %p80
      $region18: #{decoder_block.1} parent=11 // pred_check_branch
        %189 = sbr.rel (%p187) target = $region20
      $region19: #{decoder_block.1} parent=11 // pred_region
        _
      $region20: #{decoder_block.1} parent=11 // pred_fallthru
        _
      // Predicated region
      $region21: #{decoder_block.1} parent=11 // pred_check
        %p190 = pneg %p101
      $region22: #{decoder_block.1} parent=11 // pred_check_branch
        %192 = sbr.rel (%p190) target = $region24
      $region23: #{decoder_block.1} parent=11 // pred_region
        _
      $region24: #{decoder_block.1} parent=11 // pred_fallthru
        _
      // Predicated region
      $region25: #{decoder_block.1} parent=11 // pred_check
        %p193 = pneg %p122
      $region26: #{decoder_block.1} parent=11 // pred_check_branch
        %195 = sbr.rel (%p193) target = $region28
      $region27: #{decoder_block.1} parent=11 // pred_region
        _
      $region28: #{decoder_block.1} parent=11 // pred_fallthru
        _
      // Predicated region
      $region29: #{decoder_block.1} parent=11 // pred_check
        %p196 = pneg %p143
      $region30: #{decoder_block.1} parent=11 // pred_check_branch
        %198 = sbr.rel (%p196) target = $region32
      $region31: #{decoder_block.1} parent=11 // pred_region
        _
      $region32: #{decoder_block.1} parent=11 // pred_fallthru
        _
    $region12: #{decoder_block.1} parent=5 // pred_fallthru
      _
    %p199 = scmp.lt.s32.totalorder %s12, 2
    // Predicated region
    $region33: #{decoder_block.1} parent=5 // pred_check
      %p200 = pneg %p199
    $region34: #{decoder_block.1} parent=5 // pred_check_branch
      %202 = sbr.rel (%p200) target = $region36
    $region35: #{decoder_block.1} parent=5 // pred_region
      // Predicated region
      $region37: #{decoder_block.1} parent=35 // pred_check
        %p203 = pneg %p32
      $region38: #{decoder_block.1} parent=35 // pred_check_branch
        %205 = sbr.rel (%p203) target = $region40
      $region39: #{decoder_block.1} parent=35 // pred_region
        %p206 = scmp.lt.s32.totalorder %s12, 1
        %s207 = scalar_select %p206, %s12, 1
        %s208 = smul.addr %s207, 4
        %s209 = smul.addr %s208, 8
        %s210 = scalar_lea.vmem %s0, %s209
      $region40: #{decoder_block.1} parent=35 // pred_fallthru
        _
    $region36: #{decoder_block.1} parent=5 // pred_fallthru
      _
    %p211 = scmp.le.s32.totalorder 1, %s12
    %p212 = scmp.lt.s32.totalorder %s12, 3
    %p213 = pnand %p211, %p212
    %p214 = pneg %p213
    // Predicated region
    $region41: #{decoder_block.1} parent=5 // pred_check
      _
    $region42: #{decoder_block.1} parent=5 // pred_check_branch
      %216 = sbr.rel (%p213) target = $region44
    $region43: #{decoder_block.1} parent=5 // pred_region
      %s217 = ssub.s32 %s12, 1
      %p218 = scmp.lt.s32.totalorder %s17, 1
      %s219 = scalar_select %p218, %s17, 1
      %s220 = smul.addr %s219, 4
      %s221 = smul.addr %s220, 8
      %s222 = scalar_lea.vmem %s0, %s221
      %p223 = pneg %p38
      %p224 = pneg %p35
      %p225 = pneg %p59
      %p226 = pneg %p56
      %p227 = pneg %p80
      %p228 = pneg %p77
      %p229 = pneg %p101
      %p230 = pneg %p98
      %p231 = pneg %p122
      %p232 = pneg %p119
      %p233 = pneg %p143
      %p234 = pneg %p140
      %p235 = pneg %p169
      %p236 = pneg %p166
      %p237 = scmp.lt.s32.totalorder %s17, 1
      %s238 = scalar_select %p237, %s17, 1
      %s239 = smul.addr %s238, 8
      %s240 = smul.addr %s239, 8
      %s241 = scalar_lea.vmem %s6, %s240
      %p242 = scmp.lt.s32.totalorder %s17, 1
      %s243 = scalar_select %p242, %s17, 1
      %s244 = smul.addr %s243, 4
      %s245 = smul.addr %s244, 8
      %s246 = scalar_lea.vmem %s0, %s245
      %p247 = scmp.lt.s32.totalorder %s17, 1
      %s248 = scalar_select %p247, %s17, 1
      %s249 = smul.addr %s248, 8
      %s250 = smul.addr %s249, 8
      %s251 = scalar_lea.vmem %s6, %s250
      %v252 = vld [vmem:[%s246] sm:$0xff]
      %v253 = vld [vmem:[%s246 + $0x8] sm:$0xff]
      %v254 = vld [vmem:[%s246 + $0x10] sm:$0xff]
      %v255 = vld [vmem:[%s246 + $0x18] sm:$0xff]
      %v256 = vld [vmem:[%s2] sm:$0xf]
      %v257 = vld [vmem:[%s3] sm:$0xf]
      %259 = vset.pattern.permute.xlu0 0
      %260 = vperm.xlu0 %259, %v257
      %v261 = vpop.permute.xlu0 %260
      %vm263 = vcmask 130048
      %v265 = vsel %vm263, %v256, 0
      %267 = vmatprep.subr.mxu0 %v253
      %268 = vmatpush1.msra.mxu0 %v252
      %269 = vmatprep.subr.mxu0 %v255
      %270 = vmatpush1.msra.mxu0 %v254
      %271 = vmatprep.subr.mxu0 0.0
      %272 = vmatpush1.msra.mxu0 0.0
      %273 = vmatprep.subr.mxu0 0.0
      %274 = vmatpush1.msra.mxu0 0.0
      %275 = vmatprep.subr.mxu0 0.0
      %276 = vmatpush1.msra.mxu0 0.0
      %277 = vmatprep.subr.mxu0 0.0
      %278 = vmatpush1.msra.mxu0 0.0
      %279 = vmatprep.subr.mxu0 0.0
      %280 = vmatpush1.msra.mxu0 0.0
      %281 = vmatprep.subr.mxu0 0.0
      %282 = vmatpush1.msra.mxu0 0.0
      %283 = vmatprep.subr.mxu0 0.0
      %284 = vmatpush1.msra.mxu0 0.0
      %285 = vmatprep.subr.mxu0 0.0
      %286 = vmatpush1.msra.mxu0 0.0
      %287 = vmatprep.subr.mxu0 0.0
      %288 = vmatpush1.msra.mxu0 0.0
      %289 = vmatprep.subr.mxu0 0.0
      %290 = vmatpush1.msra.mxu0 0.0
      %291 = vmatprep.subr.mxu0 0.0
      %292 = vmatpush1.msra.mxu0 0.0
      %293 = vmatprep.subr.mxu0 0.0
      %294 = vmatpush1.msra.mxu0 0.0
      %295 = vmatprep.subr.mxu0 0.0
      %296 = vmatpush1.msra.mxu0 0.0
      %297 = vmatprep.subr.mxu0 0.0
      %298 = vmatpush1.msra.mxu0 0.0
      %299 = vmatprep.subr.mxu0 0.0
      %300 = vmatpush1.msra.mxu0 0.0
      %301 = vmatprep.subr.mxu0 0.0
      %302 = vmatpush1.msra.mxu0 0.0
      %303 = vmatprep.subr.mxu0 0.0
      %304 = vmatpush1.msra.mxu0 0.0
      %305 = vmatprep.subr.mxu0 0.0
      %306 = vmatpush1.msra.mxu0 0.0
      %307 = vmatprep.subr.mxu0 0.0
      %308 = vmatpush1.msra.mxu0 0.0
      %309 = vmatprep.subr.mxu0 0.0
      %310 = vmatpush1.msra.mxu0 0.0
      %311 = vmatprep.subr.mxu0 0.0
      %312 = vmatpush1.msra.mxu0 0.0
      %313 = vmatprep.subr.mxu0 0.0
      %314 = vmatpush1.msra.mxu0 0.0
      %315 = vmatprep.subr.mxu0 0.0
      %316 = vmatpush1.msra.mxu0 0.0
      %317 = vmatprep.subr.mxu0 0.0
      %318 = vmatpush1.msra.mxu0 0.0
      %319 = vmatprep.subr.mxu0 0.0
      %320 = vmatpush1.msra.mxu0 0.0
      %321 = vmatprep.subr.mxu0 0.0
      %322 = vmatpush1.msra.mxu0 0.0
      %323 = vmatprep.subr.mxu0 0.0
      %324 = vmatpush1.msra.mxu0 0.0
      %325 = vmatprep.subr.mxu0 0.0
      %326 = vmatpush1.msra.mxu0 0.0
      %327 = vmatprep.subr.mxu0 0.0
      %328 = vmatpush1.msra.mxu0 0.0
      %329 = vmatprep.subr.mxu0 0.0
      %330 = vmatpush1.msra.mxu0 0.0
      %331 = vmatprep.mubr.f32.mxu0 0.0
      %332 = vmatmul.mubr.f32.gmra.mrb[0].mxu0 %v265
      %v333 = vpop.f32.mrb[0].mxu0
      %v334 = vadd.f32 %v261, %v333
      %v335 = vpop.f32.mrb[0].mxu0
      %v336 = vadd.f32 %v261, %v335
      %337 = vdwg.mxu0
      %v338 = vmax.f32 %v334, 0.0
      %v339 = vmax.f32 %v336, 0.0
      %v343 = vcombine.low 0.0, %v338
      %v344 = vcombine.low %v339, 0.0
      %347 = vst [vmem:[#allocation2] sm:$0xff] %v343
      %348 = vst [vmem:[#allocation2 + $0x8] sm:$0xff] %v344
      %v349 = vld [vmem:[%s1] sm:$0xf]
      %v350 = vld [vmem:[#allocation2] sm:$0xff]
      %v351 = vld [vmem:[#allocation2 + $0x8] sm:$0xf]
      %v353 = vlaneseq
      %v354 = vshrl.u32 %v353, 7
      %v355 = vsub.s32 0, %v354
      %v356 = vrot.slane %v349, %v355
      %v357 = vlaneseq
      %v358 = vshrl.u32 %v357, 7
      %v359 = vsub.s32 2, %v358
      %v360 = vrot.slane %v349, %v359
      %v363 = vlaneseq
      %v364 = vshrl.u32 %v363, 7
      %v365 = vsub.s32 0, %v364
      %v366 = vrot.slane %v356, %v365
      %v367 = vlaneseq
      %v368 = vshrl.u32 %v367, 7
      %v369 = vsub.s32 0, %v368
      %v370 = vrot.slane %v360, %v369
      %v373 = vcombine.low %v366, %v370
      %374 = vrot.lane.b32.xlu0 %v373, 111
      %v375 = vpop.permute.xlu0 %374
      %v376 = vrot.slane %v375, 4
      %vm377 = vcmask 908288
      %v378 = vsel %vm377, %v376, %v375
      %v381 = vmul.f32 %v350, %v378
      %v382 = vmul.f32 %v351, %v376
      %v383 = vld [vmem:[%s4] sm:$0xff]
      %v384 = vld [vmem:[%s4 + $0x8] sm:$0xff]
      %v385 = vld [vmem:[%s4 + $0x10] sm:$0xff]
      %v386 = vld [vmem:[%s4 + $0x18] sm:$0xff]
      %s387 = scalar_lea.vmem %s4, 32
      %v388 = vld [vmem:[%s387] sm:$0xff]
      %v389 = vld [vmem:[%s387 + $0x8] sm:$0xff]
      %v390 = vld [vmem:[%s387 + $0x10] sm:$0xff]
      %v391 = vld [vmem:[%s387 + $0x18] sm:$0xff]
      %v394 = vcombine.high %v350, %v350
      %395 = vrot.lane.b32.xlu0 %v350, 16
      %v396 = vpop.permute.xlu0 %395
      %397 = vrot.lane.b32.xlu0 %v394, 16
      %v398 = vpop.permute.xlu0 %397
      %399 = vrot.lane.b32.xlu0 %v351, 16
      %v400 = vpop.permute.xlu0 %399
      %v401 = vsel %vm263, %v396, %v398
      %v402 = vsel %vm263, %v398, %v400
      %vm403 = vcmask 31744
      %v405 = vsel %vm403, %v388, 0
      %v408 = vsel %vm403, %v389, 0
      %v411 = vsel %vm403, %v390, 0
      %v414 = vsel %vm403, %v391, 0
      %vm416 = vcmask 1043456
      %v417 = vsel %vm416, %v401, 0
      %v419 = vsel %vm416, %v402, 0
      %421 = vmatprep.subr.mxu0 %v419
      %422 = vmatpush1.msra.mxu0 %v417
      %423 = vmatprep.subr.mxu0 0.0
      %424 = vmatpush1.msra.mxu0 0.0
      %425 = vmatprep.subr.mxu0 0.0
      %426 = vmatpush1.msra.mxu0 0.0
      %427 = vmatprep.subr.mxu0 0.0
      %428 = vmatpush1.msra.mxu0 0.0
      %429 = vmatprep.subr.mxu0 0.0
      %430 = vmatpush1.msra.mxu0 0.0
      %431 = vmatprep.subr.mxu0 0.0
      %432 = vmatpush1.msra.mxu0 0.0
      %433 = vmatprep.subr.mxu0 0.0
      %434 = vmatpush1.msra.mxu0 0.0
      %435 = vmatprep.subr.mxu0 0.0
      %436 = vmatpush1.msra.mxu0 0.0
      %437 = vmatprep.subr.mxu0 0.0
      %438 = vmatpush1.msra.mxu0 0.0
      %439 = vmatprep.subr.mxu0 0.0
      %440 = vmatpush1.msra.mxu0 0.0
      %441 = vmatprep.subr.mxu0 0.0
      %442 = vmatpush1.msra.mxu0 0.0
      %443 = vmatprep.subr.mxu0 0.0
      %444 = vmatpush1.msra.mxu0 0.0
      %445 = vmatprep.subr.mxu0 0.0
      %446 = vmatpush1.msra.mxu0 0.0
      %447 = vmatprep.subr.mxu0 0.0
      %448 = vmatpush1.msra.mxu0 0.0
      %449 = vmatprep.subr.mxu0 0.0
      %450 = vmatpush1.msra.mxu0 0.0
      %451 = vmatprep.subr.mxu0 0.0
      %452 = vmatpush1.msra.mxu0 0.0
      %453 = vmatprep.subr.mxu0 0.0
      %454 = vmatpush1.msra.mxu0 0.0
      %455 = vmatprep.subr.mxu0 0.0
      %456 = vmatpush1.msra.mxu0 0.0
      %457 = vmatprep.subr.mxu0 0.0
      %458 = vmatpush1.msra.mxu0 0.0
      %459 = vmatprep.subr.mxu0 0.0
      %460 = vmatpush1.msra.mxu0 0.0
      %461 = vmatprep.subr.mxu0 0.0
      %462 = vmatpush1.msra.mxu0 0.0
      %463 = vmatprep.subr.mxu0 0.0
      %464 = vmatpush1.msra.mxu0 0.0
      %465 = vmatprep.subr.mxu0 0.0
      %466 = vmatpush1.msra.mxu0 0.0
      %467 = vmatprep.subr.mxu0 0.0
      %468 = vmatpush1.msra.mxu0 0.0
      %469 = vmatprep.subr.mxu0 0.0
      %470 = vmatpush1.msra.mxu0 0.0
      %471 = vmatprep.subr.mxu0 0.0
      %472 = vmatpush1.msra.mxu0 0.0
      %473 = vmatprep.subr.mxu0 0.0
      %474 = vmatpush1.msra.mxu0 0.0
      %475 = vmatprep.subr.mxu0 0.0
      %476 = vmatpush1.msra.mxu0 0.0
      %477 = vmatprep.subr.mxu0 0.0
      %478 = vmatpush1.msra.mxu0 0.0
      %479 = vmatprep.subr.mxu0 0.0
      %480 = vmatpush1.msra.mxu0 0.0
      %481 = vmatprep.subr.mxu0 0.0
      %482 = vmatpush1.msra.mxu0 0.0
      %483 = vmatprep.subr.mxu0 0.0
      %484 = vmatpush1.msra.mxu0 0.0
      %485 = vmatprep.mubr.f32.mxu0 0.0
      %486 = vmatmul.mubr.f32.gmra.mrb[0].mxu0 %v405
      %v487 = vpop.f32.mrb[0].mxu0
      %v488 = vadd.f32 0.0, %v487
      %v489 = vpop.f32.mrb[0].mxu0
      %v490 = vadd.f32 0.0, %v489
      %491 = vmatprep.mubr.f32.mxu0 0.0
      %492 = vmatmul.mubr.f32.gmra.mrb[0].mxu0 %v408
      %v493 = vpop.f32.mrb[0].mxu0
      %v494 = vadd.f32 0.0, %v493
      %v495 = vpop.f32.mrb[0].mxu0
      %v496 = vadd.f32 0.0, %v495
      %497 = vmatprep.mubr.f32.mxu0 0.0
      %498 = vmatmul.mubr.f32.gmra.mrb[0].mxu0 %v411
      %v499 = vpop.f32.mrb[0].mxu0
      %v500 = vadd.f32 0.0, %v499
      %v501 = vpop.f32.mrb[0].mxu0
      %v502 = vadd.f32 0.0, %v501
      %503 = vmatprep.mubr.f32.mxu0 0.0
      %504 = vmatmul.mubr.f32.gmra.mrb[0].mxu0 %v414
      %v505 = vpop.f32.mrb[0].mxu0
      %v506 = vadd.f32 0.0, %v505
      %v507 = vpop.f32.mrb[0].mxu0
      %v508 = vadd.f32 0.0, %v507
      %509 = vdwg.mxu0
      %v512 = vcombine.high %v381, %v381
      %513 = vrot.lane.b32.xlu0 %v381, 17
      %v514 = vpop.permute.xlu0 %513
      %515 = vrot.lane.b32.xlu0 %v512, 17
      %v516 = vpop.permute.xlu0 %515
      %517 = vrot.lane.b32.xlu0 %v382, 17
      %v518 = vpop.permute.xlu0 %517
      %vm519 = vcmask 138240
      %v520 = vsel %vm519, %v514, %v516
      %v521 = vsel %vm519, %v516, %v518
      %v523 = vsel %vm403, %v383, 0
      %v526 = vsel %vm403, %v384, 0
      %v529 = vsel %vm403, %v385, 0
      %v532 = vsel %vm403, %v386, 0
      %v534 = vsel %vm416, %v520, 0
      %v536 = vsel %vm416, %v521, 0
      %538 = vmatprep.subr.mxu0 %v536
      %539 = vmatpush1.msra.mxu0 %v534
      %540 = vmatprep.subr.mxu0 0.0
      %541 = vmatpush1.msra.mxu0 0.0
      %542 = vmatprep.subr.mxu0 0.0
      %543 = vmatpush1.msra.mxu0 0.0
      %544 = vmatprep.subr.mxu0 0.0
      %545 = vmatpush1.msra.mxu0 0.0
      %546 = vmatprep.subr.mxu0 0.0
      %547 = vmatpush1.msra.mxu0 0.0
      %548 = vmatprep.subr.mxu0 0.0
      %549 = vmatpush1.msra.mxu0 0.0
      %550 = vmatprep.subr.mxu0 0.0
      %551 = vmatpush1.msra.mxu0 0.0
      %552 = vmatprep.subr.mxu0 0.0
      %553 = vmatpush1.msra.mxu0 0.0
      %554 = vmatprep.subr.mxu0 0.0
      %555 = vmatpush1.msra.mxu0 0.0
      %556 = vmatprep.subr.mxu0 0.0
      %557 = vmatpush1.msra.mxu0 0.0
      %558 = vmatprep.subr.mxu0 0.0
      %559 = vmatpush1.msra.mxu0 0.0
      %560 = vmatprep.subr.mxu0 0.0
      %561 = vmatpush1.msra.mxu0 0.0
      %562 = vmatprep.subr.mxu0 0.0
      %563 = vmatpush1.msra.mxu0 0.0
      %564 = vmatprep.subr.mxu0 0.0
      %565 = vmatpush1.msra.mxu0 0.0
      %566 = vmatprep.subr.mxu0 0.0
      %567 = vmatpush1.msra.mxu0 0.0
      %568 = vmatprep.subr.mxu0 0.0
      %569 = vmatpush1.msra.mxu0 0.0
      %570 = vmatprep.subr.mxu0 0.0
      %571 = vmatpush1.msra.mxu0 0.0
      %572 = vmatprep.subr.mxu0 0.0
      %573 = vmatpush1.msra.mxu0 0.0
      %574 = vmatprep.subr.mxu0 0.0
      %575 = vmatpush1.msra.mxu0 0.0
      %576 = vmatprep.subr.mxu0 0.0
      %577 = vmatpush1.msra.mxu0 0.0
      %578 = vmatprep.subr.mxu0 0.0
      %579 = vmatpush1.msra.mxu0 0.0
      %580 = vmatprep.subr.mxu0 0.0
      %581 = vmatpush1.msra.mxu0 0.0
      %582 = vmatprep.subr.mxu0 0.0
      %583 = vmatpush1.msra.mxu0 0.0
      %584 = vmatprep.subr.mxu0 0.0
      %585 = vmatpush1.msra.mxu0 0.0
      %586 = vmatprep.subr.mxu0 0.0
      %587 = vmatpush1.msra.mxu0 0.0
      %588 = vmatprep.subr.mxu0 0.0
      %589 = vmatpush1.msra.mxu0 0.0
      %590 = vmatprep.subr.mxu0 0.0
      %591 = vmatpush1.msra.mxu0 0.0
      %592 = vmatprep.subr.mxu0 0.0
      %593 = vmatpush1.msra.mxu0 0.0
      %594 = vmatprep.subr.mxu0 0.0
      %595 = vmatpush1.msra.mxu0 0.0
      %596 = vmatprep.subr.mxu0 0.0
      %597 = vmatpush1.msra.mxu0 0.0
      %598 = vmatprep.subr.mxu0 0.0
      %599 = vmatpush1.msra.mxu0 0.0
      %600 = vmatprep.subr.mxu0 0.0
      %601 = vmatpush1.msra.mxu0 0.0
      %602 = vmatprep.mubr.f32.mxu0 0.0
      %603 = vmatmul.mubr.f32.gmra.mrb[0].mxu0 %v523
      %v604 = vpop.f32.mrb[0].mxu0
      %v605 = vadd.f32 %v488, %v604
      %v606 = vpop.f32.mrb[0].mxu0
      %v607 = vadd.f32 %v490, %v606
      %608 = vmatprep.mubr.f32.mxu0 0.0
      %609 = vmatmul.mubr.f32.gmra.mrb[0].mxu0 %v526
      %v610 = vpop.f32.mrb[0].mxu0
      %v611 = vadd.f32 %v494, %v610
      %v612 = vpop.f32.mrb[0].mxu0
      %v613 = vadd.f32 %v496, %v612
      %614 = vmatprep.mubr.f32.mxu0 0.0
      %615 = vmatmul.mubr.f32.gmra.mrb[0].mxu0 %v529
      %v616 = vpop.f32.mrb[0].mxu0
      %v617 = vadd.f32 %v500, %v616
      %v618 = vpop.f32.mrb[0].mxu0
      %v619 = vadd.f32 %v502, %v618
      %620 = vmatprep.mubr.f32.mxu0 0.0
      %621 = vmatmul.mubr.f32.gmra.mrb[0].mxu0 %v532
      %v622 = vpop.f32.mrb[0].mxu0
      %v623 = vadd.f32 %v506, %v622
      %v624 = vpop.f32.mrb[0].mxu0
      %v625 = vadd.f32 %v508, %v624
      %626 = vdwg.mxu0
      %v627 = vld [vmem:[#allocation2] sm:$0xff]
      %v628 = vld [vmem:[#allocation2 + $0x8] sm:$0xf]
      %v629 = vlaneseq
      %v630 = vshrl.u32 %v629, 7
      %v631 = vsub.s32 1, %v630
      %v632 = vrot.slane %v349, %v631
      %v633 = vlaneseq
      %v634 = vshrl.u32 %v633, 7
      %v635 = vsub.s32 3, %v634
      %v636 = vrot.slane %v349, %v635
      %v639 = vlaneseq
      %v640 = vshrl.u32 %v639, 7
      %v641 = vsub.s32 1, %v640
      %v642 = vrot.slane %v632, %v641
      %v643 = vlaneseq
      %v644 = vshrl.u32 %v643, 7
      %v645 = vsub.s32 1, %v644
      %v646 = vrot.slane %v636, %v645
      %v649 = vcombine.low %v642, %v646
      %650 = vrot.lane.b32.xlu0 %v649, 113
      %v651 = vpop.permute.xlu0 %650
      %v652 = vrot.slane %v651, 4
      %vm653 = vcmask 924672
      %v654 = vsel %vm653, %v652, %v651
      %v657 = vmul.f32 %v627, %v654
      %v658 = vmul.f32 %v628, %v652
      %s659 = scalar_lea.vmem %s4, 64
      %v660 = vld [vmem:[%s659] sm:$0xff]
      %v661 = vld [vmem:[%s659 + $0x8] sm:$0xff]
      %v662 = vld [vmem:[%s659 + $0x10] sm:$0xff]
      %v663 = vld [vmem:[%s659 + $0x18] sm:$0xff]
      %v666 = vcombine.high %v657, %v657
      %667 = vrot.lane.b32.xlu0 %v657, 15
      %v668 = vpop.permute.xlu0 %667
      %669 = vrot.lane.b32.xlu0 %v666, 15
      %v670 = vpop.permute.xlu0 %669
      %671 = vrot.lane.b32.xlu0 %v658, 15
      %v672 = vpop.permute.xlu0 %671
      %vm673 = vcmask 121856
      %v674 = vsel %vm673, %v668, %v670
      %v675 = vsel %vm673, %v670, %v672
      %v677 = vsel %vm403, %v660, 0
      %v680 = vsel %vm403, %v661, 0
      %v683 = vsel %vm403, %v662, 0
      %v686 = vsel %vm403, %v663, 0
      %v688 = vsel %vm416, %v674, 0
      %v690 = vsel %vm416, %v675, 0
      %692 = vmatprep.subr.mxu0 %v690
      %693 = vmatpush1.msra.mxu0 %v688
      %694 = vmatprep.subr.mxu0 0.0
      %695 = vmatpush1.msra.mxu0 0.0
      %696 = vmatprep.subr.mxu0 0.0
      %697 = vmatpush1.msra.mxu0 0.0
      %698 = vmatprep.subr.mxu0 0.0
      %699 = vmatpush1.msra.mxu0 0.0
      %700 = vmatprep.subr.mxu0 0.0
      %701 = vmatpush1.msra.mxu0 0.0
      %702 = vmatprep.subr.mxu0 0.0
      %703 = vmatpush1.msra.mxu0 0.0
      %704 = vmatprep.subr.mxu0 0.0
      %705 = vmatpush1.msra.mxu0 0.0
      %706 = vmatprep.subr.mxu0 0.0
      %707 = vmatpush1.msra.mxu0 0.0
      %708 = vmatprep.subr.mxu0 0.0
      %709 = vmatpush1.msra.mxu0 0.0
      %710 = vmatprep.subr.mxu0 0.0
      %711 = vmatpush1.msra.mxu0 0.0
      %712 = vmatprep.subr.mxu0 0.0
      %713 = vmatpush1.msra.mxu0 0.0
      %714 = vmatprep.subr.mxu0 0.0
      %715 = vmatpush1.msra.mxu0 0.0
      %716 = vmatprep.subr.mxu0 0.0
      %717 = vmatpush1.msra.mxu0 0.0
      %718 = vmatprep.subr.mxu0 0.0
      %719 = vmatpush1.msra.mxu0 0.0
      %720 = vmatprep.subr.mxu0 0.0
      %721 = vmatpush1.msra.mxu0 0.0
      %722 = vmatprep.subr.mxu0 0.0
      %723 = vmatpush1.msra.mxu0 0.0
      %724 = vmatprep.subr.mxu0 0.0
      %725 = vmatpush1.msra.mxu0 0.0
      %726 = vmatprep.subr.mxu0 0.0
      %727 = vmatpush1.msra.mxu0 0.0
      %728 = vmatprep.subr.mxu0 0.0
      %729 = vmatpush1.msra.mxu0 0.0
      %730 = vmatprep.subr.mxu0 0.0
      %731 = vmatpush1.msra.mxu0 0.0
      %732 = vmatprep.subr.mxu0 0.0
      %733 = vmatpush1.msra.mxu0 0.0
      %734 = vmatprep.subr.mxu0 0.0
      %735 = vmatpush1.msra.mxu0 0.0
      %736 = vmatprep.subr.mxu0 0.0
      %737 = vmatpush1.msra.mxu0 0.0
      %738 = vmatprep.subr.mxu0 0.0
      %739 = vmatpush1.msra.mxu0 0.0
      %740 = vmatprep.subr.mxu0 0.0
      %741 = vmatpush1.msra.mxu0 0.0
      %742 = vmatprep.subr.mxu0 0.0
      %743 = vmatpush1.msra.mxu0 0.0
      %744 = vmatprep.subr.mxu0 0.0
      %745 = vmatpush1.msra.mxu0 0.0
      %746 = vmatprep.subr.mxu0 0.0
      %747 = vmatpush1.msra.mxu0 0.0
      %748 = vmatprep.subr.mxu0 0.0
      %749 = vmatpush1.msra.mxu0 0.0
      %750 = vmatprep.subr.mxu0 0.0
      %751 = vmatpush1.msra.mxu0 0.0
      %752 = vmatprep.subr.mxu0 0.0
      %753 = vmatpush1.msra.mxu0 0.0
      %754 = vmatprep.subr.mxu0 0.0
      %755 = vmatpush1.msra.mxu0 0.0
      %756 = vmatprep.mubr.f32.mxu0 0.0
      %757 = vmatmul.mubr.f32.gmra.mrb[0].mxu0 %v677
      %v758 = vpop.f32.mrb[0].mxu0
      %v759 = vadd.f32 0.0, %v758
      %v760 = vpop.f32.mrb[0].mxu0
      %v761 = vadd.f32 0.0, %v760
      %762 = vmatprep.mubr.f32.mxu0 0.0
      %763 = vmatmul.mubr.f32.gmra.mrb[0].mxu0 %v680
      %v764 = vpop.f32.mrb[0].mxu0
      %v765 = vadd.f32 0.0, %v764
      %v766 = vpop.f32.mrb[0].mxu0
      %v767 = vadd.f32 0.0, %v766
      %768 = vmatprep.mubr.f32.mxu0 0.0
      %769 = vmatmul.mubr.f32.gmra.mrb[0].mxu0 %v683
      %v770 = vpop.f32.mrb[0].mxu0
      %v771 = vadd.f32 0.0, %v770
      %v772 = vpop.f32.mrb[0].mxu0
      %v773 = vadd.f32 0.0, %v772
      %774 = vmatprep.mubr.f32.mxu0 0.0
      %775 = vmatmul.mubr.f32.gmra.mrb[0].mxu0 %v686
      %v776 = vpop.f32.mrb[0].mxu0
      %v777 = vadd.f32 0.0, %v776
      %v778 = vpop.f32.mrb[0].mxu0
      %v779 = vadd.f32 0.0, %v778
      %780 = vdwg.mxu0
      %v781 = vadd.f32 %v605, %v759
      %v782 = vadd.f32 %v607, %v761
      %v783 = vadd.f32 %v611, %v765
      %v784 = vadd.f32 %v613, %v767
      %v785 = vadd.f32 %v617, %v771
      %v786 = vadd.f32 %v619, %v773
      %v787 = vadd.f32 %v623, %v777
      %v788 = vadd.f32 %v625, %v779
      %v789 = vld [vmem:[#allocation2] sm:$0xff]
      %v790 = vld [vmem:[#allocation2 + $0x8] sm:$0xf]
      %791 = vrot.lane.b32.xlu0 %v373, 127
      %v792 = vpop.permute.xlu0 %791
      %v793 = vrot.slane %v792, 4
      %vm794 = vcmask 1039360
      %v795 = vsel %vm794, %v793, %v792
      %v798 = vmul.f32 %v789, %v795
      %v799 = vmul.f32 %v790, %v793
      %s800 = scalar_lea.vmem %s4, 96
      %v801 = vld [vmem:[%s800] sm:$0xff]
      %v802 = vld [vmem:[%s800 + $0x8] sm:$0xff]
      %v803 = vld [vmem:[%s800 + $0x10] sm:$0xff]
      %v804 = vld [vmem:[%s800 + $0x18] sm:$0xff]
      %v807 = vcombine.high %v798, %v798
      %808 = vrot.lane.b32.xlu0 %v798, 1
      %v809 = vpop.permute.xlu0 %808
      %810 = vrot.lane.b32.xlu0 %v807, 1
      %v811 = vpop.permute.xlu0 %810
      %812 = vrot.lane.b32.xlu0 %v799, 1
      %v813 = vpop.permute.xlu0 %812
      %vm814 = vcmask 7168
      %v815 = vsel %vm814, %v809, %v811
      %v816 = vsel %vm814, %v811, %v813
      %v818 = vsel %vm403, %v801, 0
      %v821 = vsel %vm403, %v802, 0
      %v824 = vsel %vm403, %v803, 0
      %v827 = vsel %vm403, %v804, 0
      %v829 = vsel %vm416, %v815, 0
      %v831 = vsel %vm416, %v816, 0
      %833 = vmatprep.subr.mxu0 %v831
      %834 = vmatpush1.msra.mxu0 %v829
      %835 = vmatprep.subr.mxu0 0.0
      %836 = vmatpush1.msra.mxu0 0.0
      %837 = vmatprep.subr.mxu0 0.0
      %838 = vmatpush1.msra.mxu0 0.0
      %839 = vmatprep.subr.mxu0 0.0
      %840 = vmatpush1.msra.mxu0 0.0
      %841 = vmatprep.subr.mxu0 0.0
      %842 = vmatpush1.msra.mxu0 0.0
      %843 = vmatprep.subr.mxu0 0.0
      %844 = vmatpush1.msra.mxu0 0.0
      %845 = vmatprep.subr.mxu0 0.0
      %846 = vmatpush1.msra.mxu0 0.0
      %847 = vmatprep.subr.mxu0 0.0
      %848 = vmatpush1.msra.mxu0 0.0
      %849 = vmatprep.subr.mxu0 0.0
      %850 = vmatpush1.msra.mxu0 0.0
      %851 = vmatprep.subr.mxu0 0.0
      %852 = vmatpush1.msra.mxu0 0.0
      %853 = vmatprep.subr.mxu0 0.0
      %854 = vmatpush1.msra.mxu0 0.0
      %855 = vmatprep.subr.mxu0 0.0
      %856 = vmatpush1.msra.mxu0 0.0
      %857 = vmatprep.subr.mxu0 0.0
      %858 = vmatpush1.msra.mxu0 0.0
      %859 = vmatprep.subr.mxu0 0.0
      %860 = vmatpush1.msra.mxu0 0.0
      %861 = vmatprep.subr.mxu0 0.0
      %862 = vmatpush1.msra.mxu0 0.0
      %863 = vmatprep.subr.mxu0 0.0
      %864 = vmatpush1.msra.mxu0 0.0
      %865 = vmatprep.subr.mxu0 0.0
      %866 = vmatpush1.msra.mxu0 0.0
      %867 = vmatprep.subr.mxu0 0.0
      %868 = vmatpush1.msra.mxu0 0.0
      %869 = vmatprep.subr.mxu0 0.0
      %870 = vmatpush1.msra.mxu0 0.0
      %871 = vmatprep.subr.mxu0 0.0
      %872 = vmatpush1.msra.mxu0 0.0
      %873 = vmatprep.subr.mxu0 0.0
      %874 = vmatpush1.msra.mxu0 0.0
      %875 = vmatprep.subr.mxu0 0.0
      %876 = vmatpush1.msra.mxu0 0.0
      %877 = vmatprep.subr.mxu0 0.0
      %878 = vmatpush1.msra.mxu0 0.0
      %879 = vmatprep.subr.mxu0 0.0
      %880 = vmatpush1.msra.mxu0 0.0
      %881 = vmatprep.subr.mxu0 0.0
      %882 = vmatpush1.msra.mxu0 0.0
      %883 = vmatprep.subr.mxu0 0.0
      %884 = vmatpush1.msra.mxu0 0.0
      %885 = vmatprep.subr.mxu0 0.0
      %886 = vmatpush1.msra.mxu0 0.0
      %887 = vmatprep.subr.mxu0 0.0
      %888 = vmatpush1.msra.mxu0 0.0
      %889 = vmatprep.subr.mxu0 0.0
      %890 = vmatpush1.msra.mxu0 0.0
      %891 = vmatprep.subr.mxu0 0.0
      %892 = vmatpush1.msra.mxu0 0.0
      %893 = vmatprep.subr.mxu0 0.0
      %894 = vmatpush1.msra.mxu0 0.0
      %895 = vmatprep.subr.mxu0 0.0
      %896 = vmatpush1.msra.mxu0 0.0
      %897 = vmatprep.mubr.f32.mxu0 0.0
      %898 = vmatmul.mubr.f32.gmra.mrb[0].mxu0 %v818
      %v899 = vpop.f32.mrb[0].mxu0
      %v900 = vadd.f32 0.0, %v899
      %v901 = vpop.f32.mrb[0].mxu0
      %v902 = vadd.f32 0.0, %v901
      %903 = vmatprep.mubr.f32.mxu0 0.0
      %904 = vmatmul.mubr.f32.gmra.mrb[0].mxu0 %v821
      %v905 = vpop.f32.mrb[0].mxu0
      %v906 = vadd.f32 0.0, %v905
      %v907 = vpop.f32.mrb[0].mxu0
      %v908 = vadd.f32 0.0, %v907
      %909 = vmatprep.mubr.f32.mxu0 0.0
      %910 = vmatmul.mubr.f32.gmra.mrb[0].mxu0 %v824
      %v911 = vpop.f32.mrb[0].mxu0
      %v912 = vadd.f32 0.0, %v911
      %v913 = vpop.f32.mrb[0].mxu0
      %v914 = vadd.f32 0.0, %v913
      %915 = vmatprep.mubr.f32.mxu0 0.0
      %916 = vmatmul.mubr.f32.gmra.mrb[0].mxu0 %v827
      %v917 = vpop.f32.mrb[0].mxu0
      %v918 = vadd.f32 0.0, %v917
      %v919 = vpop.f32.mrb[0].mxu0
      %v920 = vadd.f32 0.0, %v919
      %921 = vdwg.mxu0
      %v922 = vadd.f32 %v781, %v900
      %v923 = vadd.f32 %v782, %v902
      %v924 = vadd.f32 %v783, %v906
      %v925 = vadd.f32 %v784, %v908
      %v926 = vadd.f32 %v785, %v912
      %v927 = vadd.f32 %v786, %v914
      %v928 = vadd.f32 %v787, %v918
      %v929 = vadd.f32 %v788, %v920
      %v930 = vld [vmem:[#allocation2 + $0x4] sm:$0xff]
      %s931 = scalar_lea.vmem %s4, 128
      %v932 = vld [vmem:[%s931] sm:$0xff]
      %v933 = vld [vmem:[%s931 + $0x8] sm:$0xff]
      %v934 = vld [vmem:[%s931 + $0x10] sm:$0xff]
      %v935 = vld [vmem:[%s931 + $0x18] sm:$0xff]
      %v937 = vcombine.high %v930, %v930
      %v939 = vsel %vm403, %v932, 0
      %v942 = vsel %vm403, %v933, 0
      %v945 = vsel %vm403, %v934, 0
      %v948 = vsel %vm403, %v935, 0
      %v950 = vsel %vm416, %v930, 0
      %v952 = vsel %vm416, %v937, 0
      %954 = vmatprep.subr.mxu0 %v952
      %955 = vmatpush1.msra.mxu0 %v950
      %956 = vmatprep.subr.mxu0 0.0
      %957 = vmatpush1.msra.mxu0 0.0
      %958 = vmatprep.subr.mxu0 0.0
      %959 = vmatpush1.msra.mxu0 0.0
      %960 = vmatprep.subr.mxu0 0.0
      %961 = vmatpush1.msra.mxu0 0.0
      %962 = vmatprep.subr.mxu0 0.0
      %963 = vmatpush1.msra.mxu0 0.0
      %964 = vmatprep.subr.mxu0 0.0
      %965 = vmatpush1.msra.mxu0 0.0
      %966 = vmatprep.subr.mxu0 0.0
      %967 = vmatpush1.msra.mxu0 0.0
      %968 = vmatprep.subr.mxu0 0.0
      %969 = vmatpush1.msra.mxu0 0.0
      %970 = vmatprep.subr.mxu0 0.0
      %971 = vmatpush1.msra.mxu0 0.0
      %972 = vmatprep.subr.mxu0 0.0
      %973 = vmatpush1.msra.mxu0 0.0
      %974 = vmatprep.subr.mxu0 0.0
      %975 = vmatpush1.msra.mxu0 0.0
      %976 = vmatprep.subr.mxu0 0.0
      %977 = vmatpush1.msra.mxu0 0.0
      %978 = vmatprep.subr.mxu0 0.0
      %979 = vmatpush1.msra.mxu0 0.0
      %980 = vmatprep.subr.mxu0 0.0
      %981 = vmatpush1.msra.mxu0 0.0
      %982 = vmatprep.subr.mxu0 0.0
      %983 = vmatpush1.msra.mxu0 0.0
      %984 = vmatprep.subr.mxu0 0.0
      %985 = vmatpush1.msra.mxu0 0.0
      %986 = vmatprep.subr.mxu0 0.0
      %987 = vmatpush1.msra.mxu0 0.0
      %988 = vmatprep.subr.mxu0 0.0
      %989 = vmatpush1.msra.mxu0 0.0
      %990 = vmatprep.subr.mxu0 0.0
      %991 = vmatpush1.msra.mxu0 0.0
      %992 = vmatprep.subr.mxu0 0.0
      %993 = vmatpush1.msra.mxu0 0.0
      %994 = vmatprep.subr.mxu0 0.0
      %995 = vmatpush1.msra.mxu0 0.0
      %996 = vmatprep.subr.mxu0 0.0
      %997 = vmatpush1.msra.mxu0 0.0
      %998 = vmatprep.subr.mxu0 0.0
      %999 = vmatpush1.msra.mxu0 0.0
      %1000 = vmatprep.subr.mxu0 0.0
      %1001 = vmatpush1.msra.mxu0 0.0
      %1002 = vmatprep.subr.mxu0 0.0
      %1003 = vmatpush1.msra.mxu0 0.0
      %1004 = vmatprep.subr.mxu0 0.0
      %1005 = vmatpush1.msra.mxu0 0.0
      %1006 = vmatprep.subr.mxu0 0.0
      %1007 = vmatpush1.msra.mxu0 0.0
      %1008 = vmatprep.subr.mxu0 0.0
      %1009 = vmatpush1.msra.mxu0 0.0
      %1010 = vmatprep.subr.mxu0 0.0
      %1011 = vmatpush1.msra.mxu0 0.0
      %1012 = vmatprep.subr.mxu0 0.0
      %1013 = vmatpush1.msra.mxu0 0.0
      %1014 = vmatprep.subr.mxu0 0.0
      %1015 = vmatpush1.msra.mxu0 0.0
      %1016 = vmatprep.subr.mxu0 0.0
      %1017 = vmatpush1.msra.mxu0 0.0
      %1018 = vmatprep.mubr.f32.mxu0 0.0
      %1019 = vmatmul.mubr.f32.gmra.mrb[0].mxu0 %v939
      %v1020 = vpop.f32.mrb[0].mxu0
      %v1021 = vadd.f32 0.0, %v1020
      %v1022 = vpop.f32.mrb[0].mxu0
      %v1023 = vadd.f32 0.0, %v1022
      %1024 = vmatprep.mubr.f32.mxu0 0.0
      %1025 = vmatmul.mubr.f32.gmra.mrb[0].mxu0 %v942
      %v1026 = vpop.f32.mrb[0].mxu0
      %v1027 = vadd.f32 0.0, %v1026
      %v1028 = vpop.f32.mrb[0].mxu0
      %v1029 = vadd.f32 0.0, %v1028
      %1030 = vmatprep.mubr.f32.mxu0 0.0
      %1031 = vmatmul.mubr.f32.gmra.mrb[0].mxu0 %v945
      %v1032 = vpop.f32.mrb[0].mxu0
      %v1033 = vadd.f32 0.0, %v1032
      %v1034 = vpop.f32.mrb[0].mxu0
      %v1035 = vadd.f32 0.0, %v1034
      %1036 = vmatprep.mubr.f32.mxu0 0.0
      %1037 = vmatmul.mubr.f32.gmra.mrb[0].mxu0 %v948
      %v1038 = vpop.f32.mrb[0].mxu0
      %v1039 = vadd.f32 0.0, %v1038
      %v1040 = vpop.f32.mrb[0].mxu0
      %v1041 = vadd.f32 0.0, %v1040
      %1042 = vdwg.mxu0
      %v1043 = vadd.f32 %v922, %v1021
      %v1044 = vadd.f32 %v923, %v1023
      %v1045 = vadd.f32 %v924, %v1027
      %v1046 = vadd.f32 %v925, %v1029
      %v1047 = vadd.f32 %v926, %v1033
      %v1048 = vadd.f32 %v927, %v1035
      %v1049 = vadd.f32 %v928, %v1039
      %v1050 = vadd.f32 %v929, %v1041
      %v1051 = vld [vmem:[#allocation2 + $0x4] sm:$0xff]
      %v1052 = vld [vmem:[#allocation2 + $0xc] sm:$0xf]
      %1053 = vrot.lane.b32.xlu0 %v649, 1
      %v1054 = vpop.permute.xlu0 %1053
      %v1055 = vrot.slane %v1054, 4
      %v1056 = vsel %vm814, %v1055, %v1054
      %v1059 = vmul.f32 %v1051, %v1056
      %v1060 = vmul.f32 %v1052, %v1055
      %s1061 = scalar_lea.vmem %s4, 160
      %v1062 = vld [vmem:[%s1061] sm:$0xff]
      %v1063 = vld [vmem:[%s1061 + $0x8] sm:$0xff]
      %v1064 = vld [vmem:[%s1061 + $0x10] sm:$0xff]
      %v1065 = vld [vmem:[%s1061 + $0x18] sm:$0xff]
      %v1068 = vcombine.high %v1059, %v1059
      %1069 = vrot.lane.b32.xlu0 %v1059, 127
      %v1070 = vpop.permute.xlu0 %1069
      %1071 = vrot.lane.b32.xlu0 %v1068, 127
      %v1072 = vpop.permute.xlu0 %1071
      %1073 = vrot.lane.b32.xlu0 %v1060, 127
      %v1074 = vpop.permute.xlu0 %1073
      %v1075 = vsel %vm794, %v1070, %v1072
      %v1076 = vsel %vm794, %v1072, %v1074
      %v1078 = vsel %vm403, %v1062, 0
      %v1081 = vsel %vm403, %v1063, 0
      %v1084 = vsel %vm403, %v1064, 0
      %v1087 = vsel %vm403, %v1065, 0
      %v1089 = vsel %vm416, %v1075, 0
      %v1091 = vsel %vm416, %v1076, 0
      %1093 = vmatprep.subr.mxu0 %v1091
      %1094 = vmatpush1.msra.mxu0 %v1089
      %1095 = vmatprep.subr.mxu0 0.0
      %1096 = vmatpush1.msra.mxu0 0.0
      %1097 = vmatprep.subr.mxu0 0.0
      %1098 = vmatpush1.msra.mxu0 0.0
      %1099 = vmatprep.subr.mxu0 0.0
      %1100 = vmatpush1.msra.mxu0 0.0
      %1101 = vmatprep.subr.mxu0 0.0
      %1102 = vmatpush1.msra.mxu0 0.0
      %1103 = vmatprep.subr.mxu0 0.0
      %1104 = vmatpush1.msra.mxu0 0.0
      %1105 = vmatprep.subr.mxu0 0.0
      %1106 = vmatpush1.msra.mxu0 0.0
      %1107 = vmatprep.subr.mxu0 0.0
      %1108 = vmatpush1.msra.mxu0 0.0
      %1109 = vmatprep.subr.mxu0 0.0
      %1110 = vmatpush1.msra.mxu0 0.0
      %1111 = vmatprep.subr.mxu0 0.0
      %1112 = vmatpush1.msra.mxu0 0.0
      %1113 = vmatprep.subr.mxu0 0.0
      %1114 = vmatpush1.msra.mxu0 0.0
      %1115 = vmatprep.subr.mxu0 0.0
      %1116 = vmatpush1.msra.mxu0 0.0
      %1117 = vmatprep.subr.mxu0 0.0
      %1118 = vmatpush1.msra.mxu0 0.0
      %1119 = vmatprep.subr.mxu0 0.0
      %1120 = vmatpush1.msra.mxu0 0.0
      %1121 = vmatprep.subr.mxu0 0.0
      %1122 = vmatpush1.msra.mxu0 0.0
      %1123 = vmatprep.subr.mxu0 0.0
      %1124 = vmatpush1.msra.mxu0 0.0
      %1125 = vmatprep.subr.mxu0 0.0
      %1126 = vmatpush1.msra.mxu0 0.0
      %1127 = vmatprep.subr.mxu0 0.0
      %1128 = vmatpush1.msra.mxu0 0.0
      %1129 = vmatprep.subr.mxu0 0.0
      %1130 = vmatpush1.msra.mxu0 0.0
      %1131 = vmatprep.subr.mxu0 0.0
      %1132 = vmatpush1.msra.mxu0 0.0
      %1133 = vmatprep.subr.mxu0 0.0
      %1134 = vmatpush1.msra.mxu0 0.0
      %1135 = vmatprep.subr.mxu0 0.0
      %1136 = vmatpush1.msra.mxu0 0.0
      %1137 = vmatprep.subr.mxu0 0.0
      %1138 = vmatpush1.msra.mxu0 0.0
      %1139 = vmatprep.subr.mxu0 0.0
      %1140 = vmatpush1.msra.mxu0 0.0
      %1141 = vmatprep.subr.mxu0 0.0
      %1142 = vmatpush1.msra.mxu0 0.0
      %1143 = vmatprep.subr.mxu0 0.0
      %1144 = vmatpush1.msra.mxu0 0.0
      %1145 = vmatprep.subr.mxu0 0.0
      %1146 = vmatpush1.msra.mxu0 0.0
      %1147 = vmatprep.subr.mxu0 0.0
      %1148 = vmatpush1.msra.mxu0 0.0
      %1149 = vmatprep.subr.mxu0 0.0
      %1150 = vmatpush1.msra.mxu0 0.0
      %1151 = vmatprep.subr.mxu0 0.0
      %1152 = vmatpush1.msra.mxu0 0.0
      %1153 = vmatprep.subr.mxu0 0.0
      %1154 = vmatpush1.msra.mxu0 0.0
      %1155 = vmatprep.subr.mxu0 0.0
      %1156 = vmatpush1.msra.mxu0 0.0
      %1157 = vmatprep.mubr.f32.mxu0 0.0
      %1158 = vmatmul.mubr.f32.gmra.mrb[0].mxu0 %v1078
      %v1159 = vpop.f32.mrb[0].mxu0
      %v1160 = vadd.f32 0.0, %v1159
      %v1161 = vpop.f32.mrb[0].mxu0
      %v1162 = vadd.f32 0.0, %v1161
      %1163 = vmatprep.mubr.f32.mxu0 0.0
      %1164 = vmatmul.mubr.f32.gmra.mrb[0].mxu0 %v1081
      %v1165 = vpop.f32.mrb[0].mxu0
      %v1166 = vadd.f32 0.0, %v1165
      %v1167 = vpop.f32.mrb[0].mxu0
      %v1168 = vadd.f32 0.0, %v1167
      %1169 = vmatprep.mubr.f32.mxu0 0.0
      %1170 = vmatmul.mubr.f32.gmra.mrb[0].mxu0 %v1084
      %v1171 = vpop.f32.mrb[0].mxu0
      %v1172 = vadd.f32 0.0, %v1171
      %v1173 = vpop.f32.mrb[0].mxu0
      %v1174 = vadd.f32 0.0, %v1173
      %1175 = vmatprep.mubr.f32.mxu0 0.0
      %1176 = vmatmul.mubr.f32.gmra.mrb[0].mxu0 %v1087
      %v1177 = vpop.f32.mrb[0].mxu0
      %v1178 = vadd.f32 0.0, %v1177
      %v1179 = vpop.f32.mrb[0].mxu0
      %v1180 = vadd.f32 0.0, %v1179
      %1181 = vdwg.mxu0
      %v1182 = vadd.f32 %v1043, %v1160
      %v1183 = vadd.f32 %v1044, %v1162
      %v1184 = vadd.f32 %v1045, %v1166
      %v1185 = vadd.f32 %v1046, %v1168
      %v1186 = vadd.f32 %v1047, %v1172
      %v1187 = vadd.f32 %v1048, %v1174
      %v1188 = vadd.f32 %v1049, %v1178
      %v1189 = vadd.f32 %v1050, %v1180
      %v1190 = vld [vmem:[#allocation2 + $0x4] sm:$0xff]
      %v1191 = vld [vmem:[#allocation2 + $0xc] sm:$0xf]
      %1192 = vrot.lane.b32.xlu0 %v373, 15
      %v1193 = vpop.permute.xlu0 %1192
      %v1194 = vrot.slane %v1193, 4
      %v1195 = vsel %vm673, %v1194, %v1193
      %v1198 = vmul.f32 %v1190, %v1195
      %v1199 = vmul.f32 %v1191, %v1194
      %s1200 = scalar_lea.vmem %s4, 192
      %v1201 = vld [vmem:[%s1200] sm:$0xff]
      %v1202 = vld [vmem:[%s1200 + $0x8] sm:$0xff]
      %v1203 = vld [vmem:[%s1200 + $0x10] sm:$0xff]
      %v1204 = vld [vmem:[%s1200 + $0x18] sm:$0xff]
      %v1207 = vcombine.high %v1198, %v1198
      %1208 = vrot.lane.b32.xlu0 %v1198, 113
      %v1209 = vpop.permute.xlu0 %1208
      %1210 = vrot.lane.b32.xlu0 %v1207, 113
      %v1211 = vpop.permute.xlu0 %1210
      %1212 = vrot.lane.b32.xlu0 %v1199, 113
      %v1213 = vpop.permute.xlu0 %1212
      %v1214 = vsel %vm653, %v1209, %v1211
      %v1215 = vsel %vm653, %v1211, %v1213
      %v1217 = vsel %vm403, %v1201, 0
      %v1220 = vsel %vm403, %v1202, 0
      %v1223 = vsel %vm403, %v1203, 0
      %v1226 = vsel %vm403, %v1204, 0
      %v1228 = vsel %vm416, %v1214, 0
      %v1230 = vsel %vm416, %v1215, 0
      %1232 = vmatprep.subr.mxu0 %v1230
      %1233 = vmatpush1.msra.mxu0 %v1228
      %1234 = vmatprep.subr.mxu0 0.0
      %1235 = vmatpush1.msra.mxu0 0.0
      %1236 = vmatprep.subr.mxu0 0.0
      %1237 = vmatpush1.msra.mxu0 0.0
      %1238 = vmatprep.subr.mxu0 0.0
      %1239 = vmatpush1.msra.mxu0 0.0
      %1240 = vmatprep.subr.mxu0 0.0
      %1241 = vmatpush1.msra.mxu0 0.0
      %1242 = vmatprep.subr.mxu0 0.0
      %1243 = vmatpush1.msra.mxu0 0.0
      %1244 = vmatprep.subr.mxu0 0.0
      %1245 = vmatpush1.msra.mxu0 0.0
      %1246 = vmatprep.subr.mxu0 0.0
      %1247 = vmatpush1.msra.mxu0 0.0
      %1248 = vmatprep.subr.mxu0 0.0
      %1249 = vmatpush1.msra.mxu0 0.0
      %1250 = vmatprep.subr.mxu0 0.0
      %1251 = vmatpush1.msra.mxu0 0.0
      %1252 = vmatprep.subr.mxu0 0.0
      %1253 = vmatpush1.msra.mxu0 0.0
      %1254 = vmatprep.subr.mxu0 0.0
      %1255 = vmatpush1.msra.mxu0 0.0
      %1256 = vmatprep.subr.mxu0 0.0
      %1257 = vmatpush1.msra.mxu0 0.0
      %1258 = vmatprep.subr.mxu0 0.0
      %1259 = vmatpush1.msra.mxu0 0.0
      %1260 = vmatprep.subr.mxu0 0.0
      %1261 = vmatpush1.msra.mxu0 0.0
      %1262 = vmatprep.subr.mxu0 0.0
      %1263 = vmatpush1.msra.mxu0 0.0
      %1264 = vmatprep.subr.mxu0 0.0
      %1265 = vmatpush1.msra.mxu0 0.0
      %1266 = vmatprep.subr.mxu0 0.0
      %1267 = vmatpush1.msra.mxu0 0.0
      %1268 = vmatprep.subr.mxu0 0.0
      %1269 = vmatpush1.msra.mxu0 0.0
      %1270 = vmatprep.subr.mxu0 0.0
      %1271 = vmatpush1.msra.mxu0 0.0
      %1272 = vmatprep.subr.mxu0 0.0
      %1273 = vmatpush1.msra.mxu0 0.0
      %1274 = vmatprep.subr.mxu0 0.0
      %1275 = vmatpush1.msra.mxu0 0.0
      %1276 = vmatprep.subr.mxu0 0.0
      %1277 = vmatpush1.msra.mxu0 0.0
      %1278 = vmatprep.subr.mxu0 0.0
      %1279 = vmatpush1.msra.mxu0 0.0
      %1280 = vmatprep.subr.mxu0 0.0
      %1281 = vmatpush1.msra.mxu0 0.0
      %1282 = vmatprep.subr.mxu0 0.0
      %1283 = vmatpush1.msra.mxu0 0.0
      %1284 = vmatprep.subr.mxu0 0.0
      %1285 = vmatpush1.msra.mxu0 0.0
      %1286 = vmatprep.subr.mxu0 0.0
      %1287 = vmatpush1.msra.mxu0 0.0
      %1288 = vmatprep.subr.mxu0 0.0
      %1289 = vmatpush1.msra.mxu0 0.0
      %1290 = vmatprep.subr.mxu0 0.0
      %1291 = vmatpush1.msra.mxu0 0.0
      %1292 = vmatprep.subr.mxu0 0.0
      %1293 = vmatpush1.msra.mxu0 0.0
      %1294 = vmatprep.subr.mxu0 0.0
      %1295 = vmatpush1.msra.mxu0 0.0
      %1296 = vmatprep.mubr.f32.mxu0 0.0
      %1297 = vmatmul.mubr.f32.gmra.mrb[0].mxu0 %v1217
      %v1298 = vpop.f32.mrb[0].mxu0
      %v1299 = vadd.f32 0.0, %v1298
      %v1300 = vpop.f32.mrb[0].mxu0
      %v1301 = vadd.f32 0.0, %v1300
      %1302 = vmatprep.mubr.f32.mxu0 0.0
      %1303 = vmatmul.mubr.f32.gmra.mrb[0].mxu0 %v1220
      %v1304 = vpop.f32.mrb[0].mxu0
      %v1305 = vadd.f32 0.0, %v1304
      %v1306 = vpop.f32.mrb[0].mxu0
      %v1307 = vadd.f32 0.0, %v1306
      %1308 = vmatprep.mubr.f32.mxu0 0.0
      %1309 = vmatmul.mubr.f32.gmra.mrb[0].mxu0 %v1223
      %v1310 = vpop.f32.mrb[0].mxu0
      %v1311 = vadd.f32 0.0, %v1310
      %v1312 = vpop.f32.mrb[0].mxu0
      %v1313 = vadd.f32 0.0, %v1312
      %1314 = vmatprep.mubr.f32.mxu0 0.0
      %1315 = vmatmul.mubr.f32.gmra.mrb[0].mxu0 %v1226
      %v1316 = vpop.f32.mrb[0].mxu0
      %v1317 = vadd.f32 0.0, %v1316
      %v1318 = vpop.f32.mrb[0].mxu0
      %v1319 = vadd.f32 0.0, %v1318
      %1320 = vdwg.mxu0
      %v1321 = vadd.f32 %v1182, %v1299
      %v1322 = vadd.f32 %v1183, %v1301
      %v1323 = vadd.f32 %v1184, %v1305
      %v1324 = vadd.f32 %v1185, %v1307
      %v1325 = vadd.f32 %v1186, %v1311
      %v1326 = vadd.f32 %v1187, %v1313
      %v1327 = vadd.f32 %v1188, %v1317
      %v1328 = vadd.f32 %v1189, %v1319
      %v1329 = vld [vmem:[#allocation2 + $0x4] sm:$0xff]
      %v1330 = vld [vmem:[#allocation2 + $0xc] sm:$0xf]
      %s1331 = scalar_lea.vmem %s4, 224
      %v1332 = vld [vmem:[%s1331] sm:$0xff]
      %v1333 = vld [vmem:[%s1331 + $0x8] sm:$0xff]
      %v1334 = vld [vmem:[%s1331 + $0x10] sm:$0xff]
      %v1335 = vld [vmem:[%s1331 + $0x18] sm:$0xff]
      %v1338 = vcombine.high %v1329, %v1329
      %1339 = vrot.lane.b32.xlu0 %v1329, 112
      %v1340 = vpop.permute.xlu0 %1339
      %1341 = vrot.lane.b32.xlu0 %v1338, 112
      %v1342 = vpop.permute.xlu0 %1341
      %1343 = vrot.lane.b32.xlu0 %v1330, 112
      %v1344 = vpop.permute.xlu0 %1343
      %vm1345 = vcmask 916480
      %v1346 = vsel %vm1345, %v1340, %v1342
      %v1347 = vsel %vm1345, %v1342, %v1344
      %v1349 = vsel %vm403, %v1332, 0
      %v1352 = vsel %vm403, %v1333, 0
      %v1355 = vsel %vm403, %v1334, 0
      %v1358 = vsel %vm403, %v1335, 0
      %v1360 = vsel %vm416, %v1346, 0
      %v1362 = vsel %vm416, %v1347, 0
      %1364 = vmatprep.subr.mxu0 %v1362
      %1365 = vmatpush1.msra.mxu0 %v1360
      %1366 = vmatprep.subr.mxu0 0.0
      %1367 = vmatpush1.msra.mxu0 0.0
      %1368 = vmatprep.subr.mxu0 0.0
      %1369 = vmatpush1.msra.mxu0 0.0
      %1370 = vmatprep.subr.mxu0 0.0
      %1371 = vmatpush1.msra.mxu0 0.0
      %1372 = vmatprep.subr.mxu0 0.0
      %1373 = vmatpush1.msra.mxu0 0.0
      %1374 = vmatprep.subr.mxu0 0.0
      %1375 = vmatpush1.msra.mxu0 0.0
      %1376 = vmatprep.subr.mxu0 0.0
      %1377 = vmatpush1.msra.mxu0 0.0
      %1378 = vmatprep.subr.mxu0 0.0
      %1379 = vmatpush1.msra.mxu0 0.0
      %1380 = vmatprep.subr.mxu0 0.0
      %1381 = vmatpush1.msra.mxu0 0.0
      %1382 = vmatprep.subr.mxu0 0.0
      %1383 = vmatpush1.msra.mxu0 0.0
      %1384 = vmatprep.subr.mxu0 0.0
      %1385 = vmatpush1.msra.mxu0 0.0
      %1386 = vmatprep.subr.mxu0 0.0
      %1387 = vmatpush1.msra.mxu0 0.0
      %1388 = vmatprep.subr.mxu0 0.0
      %1389 = vmatpush1.msra.mxu0 0.0
      %1390 = vmatprep.subr.mxu0 0.0
      %1391 = vmatpush1.msra.mxu0 0.0
      %1392 = vmatprep.subr.mxu0 0.0
      %1393 = vmatpush1.msra.mxu0 0.0
      %1394 = vmatprep.subr.mxu0 0.0
      %1395 = vmatpush1.msra.mxu0 0.0
      %1396 = vmatprep.subr.mxu0 0.0
      %1397 = vmatpush1.msra.mxu0 0.0
      %1398 = vmatprep.subr.mxu0 0.0
      %1399 = vmatpush1.msra.mxu0 0.0
      %1400 = vmatprep.subr.mxu0 0.0
      %1401 = vmatpush1.msra.mxu0 0.0
      %1402 = vmatprep.subr.mxu0 0.0
      %1403 = vmatpush1.msra.mxu0 0.0
      %1404 = vmatprep.subr.mxu0 0.0
      %1405 = vmatpush1.msra.mxu0 0.0
      %1406 = vmatprep.subr.mxu0 0.0
      %1407 = vmatpush1.msra.mxu0 0.0
      %1408 = vmatprep.subr.mxu0 0.0
      %1409 = vmatpush1.msra.mxu0 0.0
      %1410 = vmatprep.subr.mxu0 0.0
      %1411 = vmatpush1.msra.mxu0 0.0
      %1412 = vmatprep.subr.mxu0 0.0
      %1413 = vmatpush1.msra.mxu0 0.0
      %1414 = vmatprep.subr.mxu0 0.0
      %1415 = vmatpush1.msra.mxu0 0.0
      %1416 = vmatprep.subr.mxu0 0.0
      %1417 = vmatpush1.msra.mxu0 0.0
      %1418 = vmatprep.subr.mxu0 0.0
      %1419 = vmatpush1.msra.mxu0 0.0
      %1420 = vmatprep.subr.mxu0 0.0
      %1421 = vmatpush1.msra.mxu0 0.0
      %1422 = vmatprep.subr.mxu0 0.0
      %1423 = vmatpush1.msra.mxu0 0.0
      %1424 = vmatprep.subr.mxu0 0.0
      %1425 = vmatpush1.msra.mxu0 0.0
      %1426 = vmatprep.subr.mxu0 0.0
      %1427 = vmatpush1.msra.mxu0 0.0
      %1428 = vmatprep.mubr.f32.mxu0 0.0
      %1429 = vmatmul.mubr.f32.gmra.mrb[0].mxu0 %v1349
      %v1430 = vpop.f32.mrb[0].mxu0
      %v1431 = vadd.f32 0.0, %v1430
      %v1432 = vpop.f32.mrb[0].mxu0
      %v1433 = vadd.f32 0.0, %v1432
      %1434 = vmatprep.mubr.f32.mxu0 0.0
      %1435 = vmatmul.mubr.f32.gmra.mrb[0].mxu0 %v1352
      %v1436 = vpop.f32.mrb[0].mxu0
      %v1437 = vadd.f32 0.0, %v1436
      %v1438 = vpop.f32.mrb[0].mxu0
      %v1439 = vadd.f32 0.0, %v1438
      %1440 = vmatprep.mubr.f32.mxu0 0.0
      %1441 = vmatmul.mubr.f32.gmra.mrb[0].mxu0 %v1355
      %v1442 = vpop.f32.mrb[0].mxu0
      %v1443 = vadd.f32 0.0, %v1442
      %v1444 = vpop.f32.mrb[0].mxu0
      %v1445 = vadd.f32 0.0, %v1444
      %1446 = vmatprep.mubr.f32.mxu0 0.0
      %1447 = vmatmul.mubr.f32.gmra.mrb[0].mxu0 %v1358
      %v1448 = vpop.f32.mrb[0].mxu0
      %v1449 = vadd.f32 0.0, %v1448
      %v1450 = vpop.f32.mrb[0].mxu0
      %v1451 = vadd.f32 0.0, %v1450
      %1452 = vdwg.mxu0
      %v1453 = vadd.f32 %v1321, %v1431
      %v1454 = vadd.f32 %v1322, %v1433
      %v1455 = vadd.f32 %v1323, %v1437
      %v1456 = vadd.f32 %v1324, %v1439
      %v1457 = vadd.f32 %v1325, %v1443
      %v1458 = vadd.f32 %v1326, %v1445
      %v1459 = vadd.f32 %v1327, %v1449
      %v1460 = vadd.f32 %v1328, %v1451
      %v1461 = vld [vmem:[#allocation2 + $0x4] sm:$0xff]
      %v1462 = vld [vmem:[#allocation2 + $0xc] sm:$0xf]
      %1463 = vrot.lane.b32.xlu0 %v649, 17
      %v1464 = vpop.permute.xlu0 %1463
      %v1465 = vrot.slane %v1464, 4
      %v1466 = vsel %vm519, %v1465, %v1464
      %v1469 = vmul.f32 %v1461, %v1466
      %v1470 = vmul.f32 %v1462, %v1465
      %s1471 = scalar_lea.vmem %s4, 256
      %v1472 = vld [vmem:[%s1471] sm:$0xff]
      %v1473 = vld [vmem:[%s1471 + $0x8] sm:$0xff]
      %v1474 = vld [vmem:[%s1471 + $0x10] sm:$0xff]
      %v1475 = vld [vmem:[%s1471 + $0x18] sm:$0xff]
      %v1478 = vcombine.high %v1469, %v1469
      %1479 = vrot.lane.b32.xlu0 %v1469, 111
      %v1480 = vpop.permute.xlu0 %1479
      %1481 = vrot.lane.b32.xlu0 %v1478, 111
      %v1482 = vpop.permute.xlu0 %1481
      %1483 = vrot.lane.b32.xlu0 %v1470, 111
      %v1484 = vpop.permute.xlu0 %1483
      %v1485 = vsel %vm377, %v1480, %v1482
      %v1486 = vsel %vm377, %v1482, %v1484
      %v1488 = vsel %vm403, %v1472, 0
      %v1491 = vsel %vm403, %v1473, 0
      %v1494 = vsel %vm403, %v1474, 0
      %v1497 = vsel %vm403, %v1475, 0
      %v1499 = vsel %vm416, %v1485, 0
      %v1501 = vsel %vm416, %v1486, 0
      %1503 = vmatprep.subr.mxu0 %v1501
      %1504 = vmatpush1.msra.mxu0 %v1499
      %1505 = vmatprep.subr.mxu0 0.0
      %1506 = vmatpush1.msra.mxu0 0.0
      %1507 = vmatprep.subr.mxu0 0.0
      %1508 = vmatpush1.msra.mxu0 0.0
      %1509 = vmatprep.subr.mxu0 0.0
      %1510 = vmatpush1.msra.mxu0 0.0
      %1511 = vmatprep.subr.mxu0 0.0
      %1512 = vmatpush1.msra.mxu0 0.0
      %1513 = vmatprep.subr.mxu0 0.0
      %1514 = vmatpush1.msra.mxu0 0.0
      %1515 = vmatprep.subr.mxu0 0.0
      %1516 = vmatpush1.msra.mxu0 0.0
      %1517 = vmatprep.subr.mxu0 0.0
      %1518 = vmatpush1.msra.mxu0 0.0
      %1519 = vmatprep.subr.mxu0 0.0
      %1520 = vmatpush1.msra.mxu0 0.0
      %1521 = vmatprep.subr.mxu0 0.0
      %1522 = vmatpush1.msra.mxu0 0.0
      %1523 = vmatprep.subr.mxu0 0.0
      %1524 = vmatpush1.msra.mxu0 0.0
      %1525 = vmatprep.subr.mxu0 0.0
      %1526 = vmatpush1.msra.mxu0 0.0
      %1527 = vmatprep.subr.mxu0 0.0
      %1528 = vmatpush1.msra.mxu0 0.0
      %1529 = vmatprep.subr.mxu0 0.0
      %1530 = vmatpush1.msra.mxu0 0.0
      %1531 = vmatprep.subr.mxu0 0.0
      %1532 = vmatpush1.msra.mxu0 0.0
      %1533 = vmatprep.subr.mxu0 0.0
      %1534 = vmatpush1.msra.mxu0 0.0
      %1535 = vmatprep.subr.mxu0 0.0
      %1536 = vmatpush1.msra.mxu0 0.0
      %1537 = vmatprep.subr.mxu0 0.0
      %1538 = vmatpush1.msra.mxu0 0.0
      %1539 = vmatprep.subr.mxu0 0.0
      %1540 = vmatpush1.msra.mxu0 0.0
      %1541 = vmatprep.subr.mxu0 0.0
      %1542 = vmatpush1.msra.mxu0 0.0
      %1543 = vmatprep.subr.mxu0 0.0
      %1544 = vmatpush1.msra.mxu0 0.0
      %1545 = vmatprep.subr.mxu0 0.0
      %1546 = vmatpush1.msra.mxu0 0.0
      %1547 = vmatprep.subr.mxu0 0.0
      %1548 = vmatpush1.msra.mxu0 0.0
      %1549 = vmatprep.subr.mxu0 0.0
      %1550 = vmatpush1.msra.mxu0 0.0
      %1551 = vmatprep.subr.mxu0 0.0
      %1552 = vmatpush1.msra.mxu0 0.0
      %1553 = vmatprep.subr.mxu0 0.0
      %1554 = vmatpush1.msra.mxu0 0.0
      %1555 = vmatprep.subr.mxu0 0.0
      %1556 = vmatpush1.msra.mxu0 0.0
      %1557 = vmatprep.subr.mxu0 0.0
      %1558 = vmatpush1.msra.mxu0 0.0
      %1559 = vmatprep.subr.mxu0 0.0
      %1560 = vmatpush1.msra.mxu0 0.0
      %1561 = vmatprep.subr.mxu0 0.0
      %1562 = vmatpush1.msra.mxu0 0.0
      %1563 = vmatprep.subr.mxu0 0.0
      %1564 = vmatpush1.msra.mxu0 0.0
      %1565 = vmatprep.subr.mxu0 0.0
      %1566 = vmatpush1.msra.mxu0 0.0
      %1567 = vmatprep.mubr.f32.mxu0 0.0
      %1568 = vmatmul.mubr.f32.gmra.mrb[0].mxu0 %v1488
      %v1569 = vpop.f32.mrb[0].mxu0
      %v1570 = vadd.f32 0.0, %v1569
      %v1571 = vpop.f32.mrb[0].mxu0
      %v1572 = vadd.f32 0.0, %v1571
      %1573 = vmatprep.mubr.f32.mxu0 0.0
      %1574 = vmatmul.mubr.f32.gmra.mrb[0].mxu0 %v1491
      %v1575 = vpop.f32.mrb[0].mxu0
      %v1576 = vadd.f32 0.0, %v1575
      %v1577 = vpop.f32.mrb[0].mxu0
      %v1578 = vadd.f32 0.0, %v1577
      %1579 = vmatprep.mubr.f32.mxu0 0.0
      %1580 = vmatmul.mubr.f32.gmra.mrb[0].mxu0 %v1494
      %v1581 = vpop.f32.mrb[0].mxu0
      %v1582 = vadd.f32 0.0, %v1581
      %v1583 = vpop.f32.mrb[0].mxu0
      %v1584 = vadd.f32 0.0, %v1583
      %1585 = vmatprep.mubr.f32.mxu0 0.0
      %1586 = vmatmul.mubr.f32.gmra.mrb[0].mxu0 %v1497
      %v1587 = vpop.f32.mrb[0].mxu0
      %v1588 = vadd.f32 0.0, %v1587
      %v1589 = vpop.f32.mrb[0].mxu0
      %v1590 = vadd.f32 0.0, %v1589
      %1591 = vdwg.mxu0
      %v1592 = vadd.f32 %v1453, %v1570
      %v1593 = vadd.f32 %v1454, %v1572
      %v1594 = vadd.f32 %v1455, %v1576
      %v1595 = vadd.f32 %v1456, %v1578
      %v1596 = vadd.f32 %v1457, %v1582
      %v1597 = vadd.f32 %v1458, %v1584
      %v1598 = vadd.f32 %v1459, %v1588
      %v1599 = vadd.f32 %v1460, %v1590
      %v1600 = vld [vmem:[%s5] sm:$0xff]
      %v1601 = vld [vmem:[%s5 + $0x8] sm:$0xff]
      %v1602 = vld [vmem:[%s5 + $0x10] sm:$0xff]
      %v1603 = vld [vmem:[%s5 + $0x18] sm:$0xff]
      %1605 = vset.pattern.permute.xlu0 0
      %1606 = vperm.xlu0 %1605, %v1600
      %v1607 = vpop.permute.xlu0 %1606
      %1610 = vset.pattern.permute.xlu0 0
      %1611 = vperm.xlu0 %1610, %v1601
      %v1612 = vpop.permute.xlu0 %1611
      %1615 = vset.pattern.permute.xlu0 0
      %1616 = vperm.xlu0 %1615, %v1602
      %v1617 = vpop.permute.xlu0 %1616
      %1620 = vset.pattern.permute.xlu0 0
      %1621 = vperm.xlu0 %1620, %v1603
      %v1622 = vpop.permute.xlu0 %1621
      %v1624 = vadd.f32 %v1592, %v1607
      %v1625 = vadd.f32 %v1593, %v1607
      %v1626 = vadd.f32 %v1594, %v1612
      %v1627 = vadd.f32 %v1595, %v1612
      %v1628 = vadd.f32 %v1596, %v1617
      %v1629 = vadd.f32 %v1597, %v1617
      %v1630 = vadd.f32 %v1598, %v1622
      %v1631 = vadd.f32 %v1599, %v1622
      %v1632 = vmax.f32 %v1624, 0.0
      %v1633 = vmax.f32 %v1625, 0.0
      %v1634 = vmax.f32 %v1626, 0.0
      %v1635 = vmax.f32 %v1627, 0.0
      %v1636 = vmax.f32 %v1628, 0.0
      %v1637 = vmax.f32 %v1629, 0.0
      %v1638 = vmax.f32 %v1630, 0.0
      %v1639 = vmax.f32 %v1631, 0.0
      %1640 = vst [vmem:[%s251] sm:$0xff] %v1632
      %1641 = vst [vmem:[%s251 + $0x8] sm:$0xff] %v1633
      %1642 = vst [vmem:[%s251 + $0x10] sm:$0xff] %v1634
      %1643 = vst [vmem:[%s251 + $0x18] sm:$0xff] %v1635
      %1644 = vst [vmem:[%s251 + $0x20] sm:$0xff] %v1636
      %1645 = vst [vmem:[%s251 + $0x28] sm:$0xff] %v1637
      %1646 = vst [vmem:[%s251 + $0x30] sm:$0xff] %v1638
      %1647 = vst [vmem:[%s251 + $0x38] sm:$0xff] %v1639
      %p1648 = scmp.lt.s32.totalorder %s17, 1
      %s1649 = scalar_select %p1648, %s17, 1
      %s1650 = smul.addr %s1649, 8
      %s1651 = smul.addr %s1650, 8
      %s1652 = scalar_lea.vmem %s6, %s1651
      // Predicated region
      $region45: #{decoder_block.1} parent=43 // pred_check
        %p1653 = pneg %p166
      $region46: #{decoder_block.1} parent=43 // pred_check_branch
        %1655 = sbr.rel (%p1653) target = $region48
      $region47: #{decoder_block.1} parent=43 // pred_region
        _
      $region48: #{decoder_block.1} parent=43 // pred_fallthru
        _
    $region44: #{decoder_block.1} parent=5 // pred_fallthru
      _
    %p1656 = scmp.le.s32.totalorder 2, %s12
    // Predicated region
    $region49: #{decoder_block.1} parent=5 // pred_check
      %p1657 = pneg %p1656
    $region50: #{decoder_block.1} parent=5 // pred_check_branch
      %1659 = sbr.rel (%p1657) target = $region52
    $region51: #{decoder_block.1} parent=5 // pred_region
      %s1660 = ssub.s32 %s12, 2
      // Predicated region
      $region53: #{decoder_block.1} parent=51 // pred_check
        %p1661 = pneg %p172
      $region54: #{decoder_block.1} parent=51 // pred_check_branch
        %1663 = sbr.rel (%p1661) target = $region56
      $region55: #{decoder_block.1} parent=51 // pred_region
        %p1664 = scmp.lt.s32.totalorder %s18, 1
        %s1665 = scalar_select %p1664, %s18, 1
        %s1666 = smul.addr %s1665, 8
        %s1667 = smul.addr %s1666, 8
        %s1668 = scalar_lea.vmem %s6, %s1667
      $region56: #{decoder_block.1} parent=51 // pred_fallthru
        _
    $region52: #{decoder_block.1} parent=5 // pred_fallthru
      _
  $region6: #{decoder_block.1} parent=0 // loop_footer
    %s16 = sadd.s32 1, %s12
  $region7: #{decoder_block.1} parent=0 // loop_footer_branch
    %11 = sbr.rel target = $region3
  $region8: #{decoder_block.1} parent=0 // loop_exit
    _

</llo_original>
